<compile_context>
chip_gen: v7x
topology: tpu7x:2x2x1
jax: 0.10.0
libtpu: 0.0.40
codegen_flags: <defaults>
</compile_context>

<pallas_src>
import functools

import jax
import jax.numpy as jnp
import numpy as np
from jax import lax
from jax.experimental import pallas as pl
from jax.experimental.pallas import tpu as pltpu


# ----------------------------- Pallas kernels -----------------------------

def _proj_kernel(x_ref, w_ref, b_ref, o_ref):
    # x: (Cin, L) bf16, w: (Cout, Cin) bf16, b: (Cout, 1) f32 -> o: (Cout, L) f32
    o_ref[...] = (jnp.dot(w_ref[...], x_ref[...],
                          preferred_element_type=jnp.float32) + b_ref[...])


def pointwise_conv_dense(x, w, b):
    """Lane-dense 1x1 conv.  x:(Cin, L) with batch folded into L (L = B*H*W),
    w:(Cout, Cin), b:(Cout,).  Single whole-array pallas_call (no grid)."""
    Cin, L = x.shape
    Cout = w.shape[0]
    flops = 2 * Cout * Cin * L
    bytes_accessed = (Cin * L + Cout * Cin) * 2 + Cout * 4 + Cout * L * 4
    return pl.pallas_call(
        _proj_kernel,
        out_shape=jax.ShapeDtypeStruct((Cout, L), jnp.float32),
        cost_estimate=pl.CostEstimate(flops=flops, transcendentals=0,
                                      bytes_accessed=bytes_accessed),
    )(x.astype(jnp.bfloat16), w.astype(jnp.bfloat16),
      b.reshape(Cout, 1).astype(jnp.float32))


def _dat_attn_kernel(q_ref, xs_ref, bias_ref, mask_ref,
                     wk_ref, bk_ref, wv_ref, bv_ref, wo_ref, bo_ref,
                     o_ref, *, n_heads, n_sample):
    """Fused proj_k + proj_v + multi-head attention + proj_out for one batch.

    q:    (1, M, nc)     bf16   (queries, token-major)
    xs:   (1, Ckv, N)    bf16   (deformed-sampled kv features)
    bias: (1, M, nh*N)   f32    (rpe bias, block-diagonal column layout)
    mask: (nc, nh*N)     f32    (block-diagonal head mask)
    out:  (1, Cq, M)     f32
    """
    f32, bf16 = jnp.float32, jnp.bfloat16
    N = n_sample

    xs = xs_ref[0]                                                  # (Ckv, N)
    # proj_k (attention scale pre-folded into wk/bk) and proj_v — stay in VMEM.
    k = jnp.dot(wk_ref[...], xs, preferred_element_type=f32) + bk_ref[...]  # (nc, N)
    v = jnp.dot(wv_ref[...], xs, preferred_element_type=f32) + bv_ref[...]  # (nc, N)

    # Block-diagonal head layout: column h*N+n of k_bd/v_bd carries head h only,
    # so ONE wide MXU contraction over all nc channels replaces n_heads tiny
    # (M, hc) x (hc, N) matmuls.
    mask = mask_ref[...]                                            # (nc, nh*N)
    k_bd = (jnp.concatenate([k] * n_heads, axis=1) * mask).astype(bf16)
    v_bd = (jnp.concatenate([v] * n_heads, axis=1) * mask).astype(bf16)

    q = q_ref[0]                                                    # (M, nc)
    s = jnp.dot(q, k_bd, preferred_element_type=f32) + bias_ref[0]  # (M, nh*N)

    # per-head softmax over each N-wide chunk (static loop, all rank-2 arrays)
    p_chunks = []
    for h in range(n_heads):
        sh = s[:, h * N:(h + 1) * N]
        sh = sh - jnp.max(sh, axis=-1, keepdims=True)
        ph = jnp.exp(sh)
        ph = ph * pl.reciprocal(jnp.sum(ph, axis=-1, keepdims=True), approx=True)
        p_chunks.append(ph)
    p = jnp.concatenate(p_chunks, axis=-1).astype(bf16)             # (M, nh*N)

    # out[c, m] = sum_n p[m, head(c)*N + n] * v[c, n]  (contract last dims)
    o = lax.dot_general(v_bd, p, (((1,), (1,)), ((), ())),
                        preferred_element_type=f32)                 # (nc, M)

    y = jnp.dot(wo_ref[...], o.astype(bf16),
                preferred_element_type=f32) + bo_ref[...]           # (Cq, M)
    o_ref[0] = y


def fused_dat_attention(q_t, x_sampled, bias_bd, wk, bk, wv, bv, wo, bo,
                        *, n_heads, scale):
    """q_t:(B,M,nc), x_sampled:(B,Ckv,N), bias_bd:(B,M,nh*N) -> (B,Cq,M)."""
    B, M, nc = q_t.shape
    Ckv, N = x_sampled.shape[1], x_sampled.shape[2]
    Cq = wo.shape[0]
    hc = nc // n_heads
    nhN = n_heads * N

    # fold the softmax scale into proj_k so the kernel does no extra multiply
    wk_s = (wk * scale).astype(jnp.bfloat16)
    bk_s = (bk * scale).reshape(nc, 1).astype(jnp.float32)
    wv_b = wv.astype(jnp.bfloat16)
    bv_b = bv.reshape(nc, 1).astype(jnp.float32)
    wo_b = wo.astype(jnp.bfloat16)
    bo_b = bo.reshape(Cq, 1).astype(jnp.float32)

    # static block-diagonal head mask: channel c belongs to head c // hc
    head_mask = jnp.asarray(
        ((np.arange(nc)[:, None] // hc) == (np.arange(nhN)[None, :] // N))
        .astype(np.float32))

    flops = int(B * (2 * 2 * nc * Ckv * N + 2 * M * nc * nhN
                     + 2 * nc * nhN * M + 2 * Cq * nc * M))
    transc = int(B * (M * nhN + M * n_heads))
    bytes_accessed = int((B * M * nc + B * Ckv * N) * 2 + B * M * nhN * 4
                         + (nc * Ckv * 2 + Cq * nc) * 2
                         + (2 * nc + Cq + nc * nhN) * 4 + B * Cq * M * 4)

    kern = functools.partial(_dat_attn_kernel, n_heads=n_heads, n_sample=N)
    return pl.pallas_call(
        kern,
        out_shape=jax.ShapeDtypeStruct((B, Cq, M), jnp.float32),
        grid=(B,),
        in_specs=[
            pl.BlockSpec((1, M, nc), lambda b: (b, 0, 0)),
            pl.BlockSpec((1, Ckv, N), lambda b: (b, 0, 0)),
            pl.BlockSpec((1, M, nhN), lambda b: (b, 0, 0)),
            pl.BlockSpec((nc, nhN), lambda b: (0, 0)),
            pl.BlockSpec((nc, Ckv), lambda b: (0, 0)),
            pl.BlockSpec((nc, 1), lambda b: (0, 0)),
            pl.BlockSpec((nc, Ckv), lambda b: (0, 0)),
            pl.BlockSpec((nc, 1), lambda b: (0, 0)),
            pl.BlockSpec((Cq, nc), lambda b: (0, 0)),
            pl.BlockSpec((Cq, 1), lambda b: (0, 0)),
        ],
        out_specs=pl.BlockSpec((1, Cq, M), lambda b: (b, 0, 0)),
        compiler_params=pltpu.CompilerParams(dimension_semantics=("parallel",)),
        cost_estimate=pl.CostEstimate(flops=flops, transcendentals=transc,
                                      bytes_accessed=bytes_accessed),
    )(q_t.astype(jnp.bfloat16), x_sampled.astype(jnp.bfloat16),
      bias_bd.astype(jnp.float32), head_mask,
      wk_s, bk_s, wv_b, bv_b, wo_b, bo_b)


# ------------------------------- JAX glue ---------------------------------

def grid_sample_bilinear(img, grid):
    """F.grid_sample(mode='bilinear', align_corners=True); grid is in-bounds.
    img:(N,C,Hin,Win); grid:(N,Ho,Wo,2) with (...,0)=x, (...,1)=y in [-1,1]."""
    N, C, Hin, Win = img.shape
    Ho, Wo = grid.shape[1], grid.shape[2]
    x = (grid[..., 0] + 1.0) * 0.5 * (Win - 1)
    y = (grid[..., 1] + 1.0) * 0.5 * (Hin - 1)
    x0 = jnp.floor(x)
    y0 = jnp.floor(y)
    wx1 = x - x0
    wy1 = y - y0
    x0i = jnp.clip(x0, 0, Win - 1).astype(jnp.int32)
    x1i = jnp.clip(x0 + 1, 0, Win - 1).astype(jnp.int32)
    y0i = jnp.clip(y0, 0, Hin - 1).astype(jnp.int32)
    y1i = jnp.clip(y0 + 1, 0, Hin - 1).astype(jnp.int32)

    flat = img.reshape(N, C, Hin * Win)

    def gather(yi, xi):
        idx = (yi * Win + xi).reshape(N, 1, Ho * Wo)
        return jnp.take_along_axis(flat, idx, axis=2).reshape(N, C, Ho, Wo)

    v00 = gather(y0i, x0i)
    v01 = gather(y0i, x1i)
    v10 = gather(y1i, x0i)
    v11 = gather(y1i, x1i)
    wx1 = wx1[:, None]
    wy1 = wy1[:, None]
    wx0 = 1.0 - wx1
    wy0 = 1.0 - wy1
    return v00 * wy0 * wx0 + v01 * wy0 * wx1 + v10 * wy1 * wx0 + v11 * wy1 * wx1


def _winit(key, shape, fan_in):
    return jax.random.normal(key, shape, jnp.float32) * (1.0 / (fan_in ** 0.5))


def init_dat_params(key, q_c, kv_c, q_h, q_w, n_heads=4, ksize=4):
    nc = q_c  # = n_heads * (q_c // n_heads)
    ks = jax.random.split(key, 8)
    return dict(
        wq=_winit(ks[0], (nc, q_c), q_c), bq=jnp.zeros((nc,), jnp.float32),
        wk=_winit(ks[1], (nc, kv_c), kv_c), bk=jnp.zeros((nc,), jnp.float32),
        wv=_winit(ks[2], (nc, kv_c), kv_c), bv=jnp.zeros((nc,), jnp.float32),
        wo=_winit(ks[3], (q_c, nc), nc), bo=jnp.zeros((q_c,), jnp.float32),
        off_dw_w=_winit(ks[4], (nc, 1, ksize, ksize), ksize * ksize),
        off_dw_b=jnp.zeros((nc,), jnp.float32),
        off_ln_g=jnp.ones((nc,), jnp.float32),
        off_ln_b=jnp.zeros((nc,), jnp.float32),
        off_pw_w=_winit(ks[5], (2, nc), nc),
        rpe_table=jax.random.normal(
            ks[6], (n_heads, 2 * q_h - 1, 2 * q_w - 1), jnp.float32) * 0.01,
    )


def dat_forward(p, q_in, kv_in, n_heads=4, stride=4, ksize=4):
    """Cross-attention DAttentionBaseline: q_in:(B,Cq,H,W), kv_in:(B,Ckv,Hkv,Wkv)."""
    B, Cq, H, W = q_in.shape
    Ckv = kv_in.shape[1]
    nc = p["wq"].shape[0]
    hc = nc // n_heads
    scale = hc ** -0.5
    M = H * W

    # proj_q: single lane-dense (nc,Cq)x(Cq,B*M) Pallas matmul
    xq = q_in.reshape(B, Cq, M).transpose(1, 0, 2).reshape(Cq, B * M)
    qp2 = pointwise_conv_dense(xq, p["wq"], p["bq"])               # (nc, B*M)
    qp_cm = qp2.reshape(nc, B, M).transpose(1, 0, 2)               # (B, nc, M)
    qp_mc = qp2.reshape(nc, B, M).transpose(1, 2, 0)               # (B, M, nc)

    # offset network: depthwise strided conv -> LayerNorm(C) -> GELU -> 1x1 conv
    # TODO(synk): strided depthwise conv + LN/GELU remain in XLA (no robust
    # Pallas TPU win at this tiny size; gathers / erf handled by XLA).
    qo = qp_cm.reshape(B, nc, H, W)
    off = lax.conv_general_dilated(
        qo, p["off_dw_w"], window_strides=(stride, stride),
        padding=[(ksize // 2, ksize // 2)] * 2,
        dimension_numbers=("NCHW", "OIHW", "NCHW"),
        feature_group_count=nc) + p["off_dw_b"].reshape(1, nc, 1, 1)
    mu = jnp.mean(off, axis=1, keepdims=True)
    var = jnp.mean((off - mu) ** 2, axis=1, keepdims=True)
    off = (off - mu) / jnp.sqrt(var + 1e-5)
    off = off * p["off_ln_g"].reshape(1, nc, 1, 1) + p["off_ln_b"].reshape(1, nc, 1, 1)
    off = jax.nn.gelu(off, approximate=False)
    Hk, Wk = off.shape[2], off.shape[3]
    n_sample = Hk * Wk
    offset = jnp.einsum("oc,bcs->bos", p["off_pw_w"],
                        off.reshape(B, nc, n_sample))              # (B, 2, n_sample)
    offset = offset.reshape(B, 2, Hk, Wk).transpose(0, 2, 3, 1)    # (B,Hk,Wk,2) (dy,dx)

    # reference points: cell centers normalized to (-1, 1), (y, x) order
    ry = (jnp.arange(Hk, dtype=jnp.float32) + 0.5) / Hk * 2.0 - 1.0
    rx = (jnp.arange(Wk, dtype=jnp.float32) + 0.5) / Wk * 2.0 - 1.0
    reference = jnp.stack(jnp.meshgrid(ry, rx, indexing="ij"), axis=-1)  # (Hk,Wk,2)

    # offset_range_factor == -1 -> no tanh scaling, clamp to valid range
    pos = jnp.clip(offset + reference[None], -1.0, 1.0)            # (B, Hk, Wk, 2)

    # deformed sampling of the kv feature map (XLA gather).  Offset channels
    # are (dy, dx) and flipped to (x, y) for grid_sample, matching DAT.
    x_sampled = grid_sample_bilinear(kv_in, pos[..., ::-1])        # (B, Ckv, Hk, Wk)
    x_flat = x_sampled.reshape(B, Ckv, n_sample)

    # continuous relative-position bias: cell-centered query grid (matches the
    # reference-point convention, avoids H==1 / W==1 division issues)
    gy = (jnp.arange(H, dtype=jnp.float32) + 0.5) / H * 2.0 - 1.0
    gx = (jnp.arange(W, dtype=jnp.float32) + 0.5) / W * 2.0 - 1.0
    q_grid = jnp.stack(jnp.meshgrid(gy, gx, indexing="ij"), axis=-1).reshape(M, 2)
    disp = (q_grid[None, :, None, :] - pos.reshape(B, 1, n_sample, 2)) * 0.5
    rpe = jnp.broadcast_to(p["rpe_table"][None], (B,) + p["rpe_table"].shape)
    attn_bias = grid_sample_bilinear(rpe, disp[..., ::-1])         # (B, heads, M, N)
    # block-diagonal column layout expected by the fused kernel: (B, M, heads*N)
    bias_bd = attn_bias.transpose(0, 2, 1, 3).reshape(B, M, n_heads * n_sample)

    # hot path: proj_k/proj_v + multi-head attention + proj_out, fused in Pallas
    y = fused_dat_attention(qp_mc, x_flat, bias_bd,
                            p["wk"], p["bk"], p["wv"], p["bv"], p["wo"], p["bo"],
                            n_heads=n_heads, scale=scale)          # (B, Cq, M)
    return y.reshape(B, Cq, H, W), pos, reference


def attention_td_forward(dat_params, hidden_variables, rev=False, use_all_channels=False):
    b = hidden_variables[0].shape[0]
    results = []
    num = 0
    for i in range(len(hidden_variables)):
        hv = hidden_variables[i]
        c_i = hv.shape[1]
        q_c1 = c_i // 2
        q_c2 = c_i - q_c1
        res = hv
        for j in range(i):
            kv_c1 = hidden_variables[j].shape[1] // 2
            q = hv[:, :q_c1]
            kv_src = results[j] if rev else hidden_variables[j]
            kv = kv_src if use_all_channels else kv_src[:, :kv_c1]
            attn, _, _ = dat_forward(dat_params[num], q, kv)
            zeros = jnp.zeros((b, q_c2) + hv.shape[2:], hv.dtype)
            attn_full = jnp.concatenate([zeros, attn.astype(hv.dtype)], axis=1)
            res = res - attn_full if rev else res + attn_full   # res -= (-1 * attn)
            num += 1
        results.append(res)
    return results, jnp.zeros((len(hidden_variables), b), hidden_variables[0].dtype)


# --------------------------------- main ------------------------------------

if __name__ == "__main__":
    B, C, H, W = 2, 32, 8, 8
    variable_dims = [(C, H, W), (C, H, W)]

    key = jax.random.PRNGKey(0)
    k_hv0, k_hv1, k_p = jax.random.split(key, 3)
    hv0 = jax.random.normal(k_hv0, (B, C, H, W), jnp.float32)
    hv1 = jax.random.normal(k_hv1, (B, C, H, W), jnp.float32)

    # mirror AttentionTD.__init__ (use_all_channels=False)
    dat_params = []
    pkeys = jax.random.split(k_p, 4)
    idx = 0
    for i in range(len(variable_dims)):
        for j in range(i):
            q_c = variable_dims[i][-3] // 2
            kv_c = variable_dims[j][-3] // 2
            dat_params.append(init_dat_params(
                pkeys[idx], q_c, kv_c, variable_dims[i][-2], variable_dims[i][-1]))
            idx += 1

    @jax.jit
    def run(a, b_):
        results, logdet = attention_td_forward(dat_params, [a, b_], rev=False)
        return results[0], results[1], logdet

    r0, r1, logdet = run(hv0, hv1)
    jax.block_until_ready((r0, r1, logdet))
    assert r0.shape == (B, C, H, W) and r1.shape == (B, C, H, W)
    assert logdet.shape == (len(variable_dims), B)
    assert bool(jnp.all(jnp.isfinite(r0))) and bool(jnp.all(jnp.isfinite(r1)))
    print("KERNEL_OK")
</pallas_src>

<mosaic_0001>
module attributes {stable_mosaic.version = 11 : i64} {
  func.func @_proj_kernel(%arg0: memref<16x128xbf16, #tpu.memory_space<vmem>>, %arg1: memref<16x16xbf16, #tpu.memory_space<vmem>>, %arg2: memref<16x1xf32, #tpu.memory_space<vmem>>, %arg3: memref<16x128xf32, #tpu.memory_space<vmem>>) attributes {dimension_semantics = [], scalar_prefetch = 0 : i64, scratch_operands = 0 : i64, tpu.core_type = #tpu.core_type<tc>} {
    %c0 = arith.constant 0 : index
    %c0_0 = arith.constant 0 : index
    %0 = vector.load %arg1[%c0, %c0_0] : memref<16x16xbf16, #tpu.memory_space<vmem>>, vector<16x16xbf16>
    %c0_1 = arith.constant 0 : index
    %c0_2 = arith.constant 0 : index
    %1 = vector.load %arg0[%c0_1, %c0_2] : memref<16x128xbf16, #tpu.memory_space<vmem>>, vector<16x128xbf16>
    %cst = arith.constant dense<0.000000e+00> : vector<16x128xf32>
    %2 = tpu.matmul %0, %1, %cst {dimension_numbers = #tpu.dot_dimension_numbers<[1], [0], [0], [1], [0, 0, 1, 1], [], []>} : vector<16x16xbf16>, vector<16x128xbf16>, vector<16x128xf32> -> vector<16x128xf32>
    %c0_3 = arith.constant 0 : index
    %c0_4 = arith.constant 0 : index
    %3 = vector.load %arg2[%c0_3, %c0_4] : memref<16x1xf32, #tpu.memory_space<vmem>>, vector<16x1xf32>
    %4 = vector.broadcast %3 : vector<16x1xf32> to vector<16x128xf32>
    %5 = arith.addf %2, %4 : vector<16x128xf32>
    %c0_5 = arith.constant 0 : index
    %c0_6 = arith.constant 0 : index
    %6 = vector.load %arg3[%c0_5, %c0_6] : memref<16x128xf32, #tpu.memory_space<vmem>>, vector<16x128xf32>
    tpu.vector_store %arg3[%c0_5, %c0_6], %5 {strides = array<i32>} : memref<16x128xf32, #tpu.memory_space<vmem>>, vector<16x128xf32>,
    return
  }
}

module attributes {stable_mosaic.version = 11 : i64} {
  func.func @_dat_attn_kernel(%arg0: i32, %arg1: memref<1x64x16xbf16, #tpu.memory_space<vmem>>, %arg2: memref<1x16x9xbf16, #tpu.memory_space<vmem>>, %arg3: memref<1x64x36xf32, #tpu.memory_space<vmem>>, %arg4: memref<16x36xf32, #tpu.memory_space<vmem>>, %arg5: memref<16x16xbf16, #tpu.memory_space<vmem>>, %arg6: memref<16x1xf32, #tpu.memory_space<vmem>>, %arg7: memref<16x16xbf16, #tpu.memory_space<vmem>>, %arg8: memref<16x1xf32, #tpu.memory_space<vmem>>, %arg9: memref<16x16xbf16, #tpu.memory_space<vmem>>, %arg10: memref<16x1xf32, #tpu.memory_space<vmem>>, %arg11: memref<1x16x64xf32, #tpu.memory_space<vmem>>) attributes {dimension_semantics = [#tpu.dimension_semantics<parallel>], iteration_bounds = array<i64: 2>, scalar_prefetch = 0 : i64, scratch_operands = 0 : i64, tpu.core_type = #tpu.core_type<tc>, window_params = [{transform_indices = @transform_0, window_bounds = array<i64: 1, 64, 16>}, {transform_indices = @transform_1, window_bounds = array<i64: 1, 16, 9>}, {transform_indices = @transform_2, window_bounds = array<i64: 1, 64, 36>}, {pipeline_mode = #tpu.pipeline_mode<synchronous>, transform_indices = @transform_3, window_bounds = array<i64: 16, 36>}, {pipeline_mode = #tpu.pipeline_mode<synchronous>, transform_indices = @transform_4, window_bounds = array<i64: 16, 16>}, {pipeline_mode = #tpu.pipeline_mode<synchronous>, transform_indices = @transform_5, window_bounds = array<i64: 16, 1>}, {pipeline_mode = #tpu.pipeline_mode<synchronous>, transform_indices = @transform_6, window_bounds = array<i64: 16, 16>}, {pipeline_mode = #tpu.pipeline_mode<synchronous>, transform_indices = @transform_7, window_bounds = array<i64: 16, 1>}, {pipeline_mode = #tpu.pipeline_mode<synchronous>, transform_indices = @transform_8, window_bounds = array<i64: 16, 16>}, {pipeline_mode = #tpu.pipeline_mode<synchronous>, transform_indices = @transform_9, window_bounds = array<i64: 16, 1>}, {transform_indices = @transform_10, window_bounds = array<i64: 1, 16, 64>}]} {
    %c0 = arith.constant 0 : index
    %c0_0 = arith.constant 0 : index
    %c0_1 = arith.constant 0 : index
    %0 = vector.load %arg2[%c0, %c0_0, %c0_1] : memref<1x16x9xbf16, #tpu.memory_space<vmem>>, vector<1x16x9xbf16>
    %1 = vector.shape_cast %0 : vector<1x16x9xbf16> to vector<16x9xbf16>
    %c0_2 = arith.constant 0 : index
    %c0_3 = arith.constant 0 : index
    %2 = vector.load %arg5[%c0_2, %c0_3] : memref<16x16xbf16, #tpu.memory_space<vmem>>, vector<16x16xbf16>
    %cst = arith.constant dense<0.000000e+00> : vector<16x9xf32>
    %3 = tpu.matmul %2, %1, %cst {dimension_numbers = #tpu.dot_dimension_numbers<[1], [0], [0], [1], [0, 0, 1, 1], [], []>} : vector<16x16xbf16>, vector<16x9xbf16>, vector<16x9xf32> -> vector<16x9xf32>
    %c0_4 = arith.constant 0 : index
    %c0_5 = arith.constant 0 : index
    %4 = vector.load %arg6[%c0_4, %c0_5] : memref<16x1xf32, #tpu.memory_space<vmem>>, vector<16x1xf32>
    %5 = vector.broadcast %4 : vector<16x1xf32> to vector<16x9xf32>
    %6 = arith.addf %3, %5 : vector<16x9xf32>
    %c0_6 = arith.constant 0 : index
    %c0_7 = arith.constant 0 : index
    %7 = vector.load %arg7[%c0_6, %c0_7] : memref<16x16xbf16, #tpu.memory_space<vmem>>, vector<16x16xbf16>
    %cst_8 = arith.constant dense<0.000000e+00> : vector<16x9xf32>
    %8 = tpu.matmul %7, %1, %cst_8 {dimension_numbers = #tpu.dot_dimension_numbers<[1], [0], [0], [1], [0, 0, 1, 1], [], []>} : vector<16x16xbf16>, vector<16x9xbf16>, vector<16x9xf32> -> vector<16x9xf32>
    %c0_9 = arith.constant 0 : index
    %c0_10 = arith.constant 0 : index
    %9 = vector.load %arg8[%c0_9, %c0_10] : memref<16x1xf32, #tpu.memory_space<vmem>>, vector<16x1xf32>
    %10 = vector.broadcast %9 : vector<16x1xf32> to vector<16x9xf32>
    %11 = arith.addf %8, %10 : vector<16x9xf32>
    %c0_11 = arith.constant 0 : index
    %c0_12 = arith.constant 0 : index
    %12 = vector.load %arg4[%c0_11, %c0_12] : memref<16x36xf32, #tpu.memory_space<vmem>>, vector<16x36xf32>
    %13 = tpu.concatenate %6, %6, %6, %6 in 1 : vector<16x9xf32>, vector<16x9xf32>, vector<16x9xf32>, vector<16x9xf32> -> vector<16x36xf32>
    %14 = arith.mulf %13, %12 : vector<16x36xf32>
    %15 = arith.truncf %14 : vector<16x36xf32> to vector<16x36xbf16>
    %16 = tpu.concatenate %11, %11, %11, %11 in 1 : vector<16x9xf32>, vector<16x9xf32>, vector<16x9xf32>, vector<16x9xf32> -> vector<16x36xf32>
    %17 = arith.mulf %16, %12 : vector<16x36xf32>
    %18 = arith.truncf %17 : vector<16x36xf32> to vector<16x36xbf16>
    %c0_13 = arith.constant 0 : index
    %c0_14 = arith.constant 0 : index
    %c0_15 = arith.constant 0 : index
    %19 = vector.load %arg1[%c0_13, %c0_14, %c0_15] : memref<1x64x16xbf16, #tpu.memory_space<vmem>>, vector<1x64x16xbf16>
    %20 = vector.shape_cast %19 : vector<1x64x16xbf16> to vector<64x16xbf16>
    %cst_16 = arith.constant dense<0.000000e+00> : vector<64x36xf32>
    %21 = tpu.matmul %20, %15, %cst_16 {dimension_numbers = #tpu.dot_dimension_numbers<[1], [0], [0], [1], [0, 0, 1, 1], [], []>} : vector<64x16xbf16>, vector<16x36xbf16>, vector<64x36xf32> -> vector<64x36xf32>
    %c0_17 = arith.constant 0 : index
    %c0_18 = arith.constant 0 : index
    %c0_19 = arith.constant 0 : index
    %22 = vector.load %arg3[%c0_17, %c0_18, %c0_19] : memref<1x64x36xf32, #tpu.memory_space<vmem>>, vector<1x64x36xf32>
    %23 = vector.shape_cast %22 : vector<1x64x36xf32> to vector<64x36xf32>
    %24 = arith.addf %21, %23 : vector<64x36xf32>
    %25 = vector.extract_strided_slice %24 {offsets = [0, 0], sizes = [64, 9], strides = [1, 1]} : vector<64x36xf32> to vector<64x9xf32>
    %cst_20 = arith.constant dense<0xFF800000> : vector<64xf32>
    %26 = vector.multi_reduction <maximumf>, %25, %cst_20 [1] : vector<64x9xf32> to vector<64xf32>
    %27 = vector.shape_cast %26 : vector<64xf32> to vector<64x1xf32>
    %28 = vector.broadcast %27 : vector<64x1xf32> to vector<64x9xf32>
    %29 = arith.subf %25, %28 : vector<64x9xf32>
    %30 = math.exp %29 : vector<64x9xf32>
    %cst_21 = arith.constant dense<0.000000e+00> : vector<64xf32>
    %31 = vector.multi_reduction <add>, %30, %cst_21 [1] : vector<64x9xf32> to vector<64xf32>
    %32 = vector.shape_cast %31 : vector<64xf32> to vector<64x1xf32>
    %33 = tpu.reciprocal %32 {approx = true} : vector<64x1xf32> -> vector<64x1xf32>
    %34 = vector.broadcast %33 : vector<64x1xf32> to vector<64x9xf32>
    %35 = arith.mulf %30, %34 : vector<64x9xf32>
    %36 = vector.extract_strided_slice %24 {offsets = [0, 9], sizes = [64, 9], strides = [1, 1]} : vector<64x36xf32> to vector<64x9xf32>
    %cst_22 = arith.constant dense<0xFF800000> : vector<64xf32>
    %37 = vector.multi_reduction <maximumf>, %36, %cst_22 [1] : vector<64x9xf32> to vector<64xf32>
    %38 = vector.shape_cast %37 : vector<64xf32> to vector<64x1xf32>
    %39 = vector.broadcast %38 : vector<64x1xf32> to vector<64x9xf32>
    %40 = arith.subf %36, %39 : vector<64x9xf32>
    %41 = math.exp %40 : vector<64x9xf32>
    %cst_23 = arith.constant dense<0.000000e+00> : vector<64xf32>
    %42 = vector.multi_reduction <add>, %41, %cst_23 [1] : vector<64x9xf32> to vector<64xf32>
    %43 = vector.shape_cast %42 : vector<64xf32> to vector<64x1xf32>
    %44 = tpu.reciprocal %43 {approx = true} : vector<64x1xf32> -> vector<64x1xf32>
    %45 = vector.broadcast %44 : vector<64x1xf32> to vector<64x9xf32>
    %46 = arith.mulf %41, %45 : vector<64x9xf32>
    %47 = vector.extract_strided_slice %24 {offsets = [0, 18], sizes = [64, 9], strides = [1, 1]} : vector<64x36xf32> to vector<64x9xf32>
    %cst_24 = arith.constant dense<0xFF800000> : vector<64xf32>
    %48 = vector.multi_reduction <maximumf>, %47, %cst_24 [1] : vector<64x9xf32> to vector<64xf32>
    %49 = vector.shape_cast %48 : vector<64xf32> to vector<64x1xf32>
    %50 = vector.broadcast %49 : vector<64x1xf32> to vector<64x9xf32>
    %51 = arith.subf %47, %50 : vector<64x9xf32>
    %52 = math.exp %51 : vector<64x9xf32>
    %cst_25 = arith.constant dense<0.000000e+00> : vector<64xf32>
    %53 = vector.multi_reduction <add>, %52, %cst_25 [1] : vector<64x9xf32> to vector<64xf32>
    %54 = vector.shape_cast %53 : vector<64xf32> to vector<64x1xf32>
    %55 = tpu.reciprocal %54 {approx = true} : vector<64x1xf32> -> vector<64x1xf32>
    %56 = vector.broadcast %55 : vector<64x1xf32> to vector<64x9xf32>
    %57 = arith.mulf %52, %56 : vector<64x9xf32>
    %58 = vector.extract_strided_slice %24 {offsets = [0, 27], sizes = [64, 9], strides = [1, 1]} : vector<64x36xf32> to vector<64x9xf32>
    %cst_26 = arith.constant dense<0xFF800000> : vector<64xf32>
    %59 = vector.multi_reduction <maximumf>, %58, %cst_26 [1] : vector<64x9xf32> to vector<64xf32>
    %60 = vector.shape_cast %59 : vector<64xf32> to vector<64x1xf32>
    %61 = vector.broadcast %60 : vector<64x1xf32> to vector<64x9xf32>
    %62 = arith.subf %58, %61 : vector<64x9xf32>
    %63 = math.exp %62 : vector<64x9xf32>
    %cst_27 = arith.constant dense<0.000000e+00> : vector<64xf32>
    %64 = vector.multi_reduction <add>, %63, %cst_27 [1] : vector<64x9xf32> to vector<64xf32>
    %65 = vector.shape_cast %64 : vector<64xf32> to vector<64x1xf32>
    %66 = tpu.reciprocal %65 {approx = true} : vector<64x1xf32> -> vector<64x1xf32>
    %67 = vector.broadcast %66 : vector<64x1xf32> to vector<64x9xf32>
    %68 = arith.mulf %63, %67 : vector<64x9xf32>
    %69 = tpu.concatenate %35, %46, %57, %68 in 1 : vector<64x9xf32>, vector<64x9xf32>, vector<64x9xf32>, vector<64x9xf32> -> vector<64x36xf32>
    %70 = arith.truncf %69 : vector<64x36xf32> to vector<64x36xbf16>
    %cst_28 = arith.constant dense<0.000000e+00> : vector<16x64xf32>
    %71 = tpu.matmul %18, %70, %cst_28 {dimension_numbers = #tpu.dot_dimension_numbers<[1], [1], [0], [0], [0, 0, 1, 0], [], []>} : vector<16x36xbf16>, vector<64x36xbf16>, vector<16x64xf32> -> vector<16x64xf32>
    %c0_29 = arith.constant 0 : index
    %c0_30 = arith.constant 0 : index
    %72 = vector.load %arg9[%c0_29, %c0_30] : memref<16x16xbf16, #tpu.memory_space<vmem>>, vector<16x16xbf16>
    %73 = arith.truncf %71 : vector<16x64xf32> to vector<16x64xbf16>
    %cst_31 = arith.constant dense<0.000000e+00> : vector<16x64xf32>
    %74 = tpu.matmul %72, %73, %cst_31 {dimension_numbers = #tpu.dot_dimension_numbers<[1], [0], [0], [1], [0, 0, 1, 1], [], []>} : vector<16x16xbf16>, vector<16x64xbf16>, vector<16x64xf32> -> vector<16x64xf32>
    %c0_32 = arith.constant 0 : index
    %c0_33 = arith.constant 0 : index
    %75 = vector.load %arg10[%c0_32, %c0_33] : memref<16x1xf32, #tpu.memory_space<vmem>>, vector<16x1xf32>
    %76 = vector.broadcast %75 : vector<16x1xf32> to vector<16x64xf32>
    %77 = arith.addf %74, %76 : vector<16x64xf32>
    %c0_34 = arith.constant 0 : index
    %c0_35 = arith.constant 0 : index
    %c0_36 = arith.constant 0 : index
    %78 = vector.load %arg11[%c0_34, %c0_35, %c0_36] : memref<1x16x64xf32, #tpu.memory_space<vmem>>, vector<1x16x64xf32>
    %79 = vector.shape_cast %78 : vector<1x16x64xf32> to vector<16x64xf32>
    %80 = vector.shape_cast %77 : vector<16x64xf32> to vector<1x16x64xf32>
    tpu.vector_store %arg11[%c0_34, %c0_35, %c0_36], %80 {strides = array<i32>} : memref<1x16x64xf32, #tpu.memory_space<vmem>>, vector<1x16x64xf32>,
    return
  }
  func.func @transform_0(%arg0: i32) -> (i32, i32, i32) {
    %c0_i32 = arith.constant 0 : i32
    %c0_i32_0 = arith.constant 0 : i32
    %c0_i32_1 = arith.constant 0 : i32
    return %arg0, %c0_i32, %c0_i32_0 : i32, i32, i32
  }
  func.func @transform_1(%arg0: i32) -> (i32, i32, i32) {
    %c0_i32 = arith.constant 0 : i32
    %c0_i32_0 = arith.constant 0 : i32
    %c0_i32_1 = arith.constant 0 : i32
    return %arg0, %c0_i32, %c0_i32_0 : i32, i32, i32
  }
  func.func @transform_2(%arg0: i32) -> (i32, i32, i32) {
    %c0_i32 = arith.constant 0 : i32
    %c0_i32_0 = arith.constant 0 : i32
    %c0_i32_1 = arith.constant 0 : i32
    return %arg0, %c0_i32, %c0_i32_0 : i32, i32, i32
  }
  func.func @transform_3(%arg0: i32) -> (i32, i32) {
    %c0_i32 = arith.constant 0 : i32
    %c0_i32_0 = arith.constant 0 : i32
    %c0_i32_1 = arith.constant 0 : i32
    return %c0_i32, %c0_i32_0 : i32, i32
  }
  func.func @transform_4(%arg0: i32) -> (i32, i32) {
    %c0_i32 = arith.constant 0 : i32
    %c0_i32_0 = arith.constant 0 : i32
    %c0_i32_1 = arith.constant 0 : i32
    return %c0_i32, %c0_i32_0 : i32, i32
  }
  func.func @transform_5(%arg0: i32) -> (i32, i32) {
    %c0_i32 = arith.constant 0 : i32
    %c0_i32_0 = arith.constant 0 : i32
    %c0_i32_1 = arith.constant 0 : i32
    return %c0_i32, %c0_i32_0 : i32, i32
  }
  func.func @transform_6(%arg0: i32) -> (i32, i32) {
    %c0_i32 = arith.constant 0 : i32
    %c0_i32_0 = arith.constant 0 : i32
    %c0_i32_1 = arith.constant 0 : i32
    return %c0_i32, %c0_i32_0 : i32, i32
  }
  func.func @transform_7(%arg0: i32) -> (i32, i32) {
    %c0_i32 = arith.constant 0 : i32
    %c0_i32_0 = arith.constant 0 : i32
    %c0_i32_1 = arith.constant 0 : i32
    return %c0_i32, %c0_i32_0 : i32, i32
  }
  func.func @transform_8(%arg0: i32) -> (i32, i32) {
    %c0_i32 = arith.constant 0 : i32
    %c0_i32_0 = arith.constant 0 : i32
    %c0_i32_1 = arith.constant 0 : i32
    return %c0_i32, %c0_i32_0 : i32, i32
  }
  func.func @transform_9(%arg0: i32) -> (i32, i32) {
    %c0_i32 = arith.constant 0 : i32
    %c0_i32_0 = arith.constant 0 : i32
    %c0_i32_1 = arith.constant 0 : i32
    return %c0_i32, %c0_i32_0 : i32, i32
  }
  func.func @transform_10(%arg0: i32) -> (i32, i32, i32) {
    %c0_i32 = arith.constant 0 : i32
    %c0_i32_0 = arith.constant 0 : i32
    %c0_i32_1 = arith.constant 0 : i32
    return %arg0, %c0_i32, %c0_i32_0 : i32, i32, i32
  }
}

</mosaic_0001>

<llo_original>
// kernel: sub.47
$region0: #{sub.47}
  %s0 = inlined_call_operand.vmem [shape: f32[2,3,3,2], index: 0, kind: input, shape index: {}]
  %s1 = inlined_call_operand.vmem [shape: f32[2,9,2], index: 1, kind: output, shape index: {}]
  $region1: #{sub.47} parent=0
    #allocation0 [shape = 'u8[8192]{0}', space=vmem, size = 0x2000, scoped, tag = 'scoped mem for output reshape']
    #allocation1 [shape = 'u8[16384]{0}', space=vmem, size = 0x4000, scoped, tag = 'scoped mem for input reshape']
    %s3 = sshllo.u32 0, 4
    %s4 = smul.addr 4, 3
    %s5 = scalar_lea.vmem %s0, %s4
    %v6 = vld [vmem:[%s5] sm:%s3]
    %s7 = scalar_lea.vmem [#allocation1], 24
    %8 = vst [vmem:[%s7] sm:%s3] %v6
    %s9 = smul.addr 4, 2
    %s10 = scalar_lea.vmem %s0, %s9
    %v11 = vld [vmem:[%s10] sm:%s3]
    %s12 = scalar_lea.vmem [#allocation1], 16
    %13 = vst [vmem:[%s12] sm:%s3] %v11
    %s14 = scalar_lea.vmem %s0, 4
    %v15 = vld [vmem:[%s14] sm:%s3]
    %s16 = scalar_lea.vmem [#allocation1], 8
    %17 = vst [vmem:[%s16] sm:%s3] %v15
    %v18 = vld [vmem:[%s0] sm:%s3]
    %19 = vst [vmem:[#allocation1] sm:%s3] %v18
    %v20 = vld [vmem:[#allocation1] ss:$8 sm:$0xf]
    %vm21 = vcmask 23552
    %22 = vst.msk [vmem:[#allocation0] sm:$0x3] %vm21, %v20
    %s23 = scalar_lea.vmem [#allocation0], 6
    %24 = vst.msk [vmem:[%s23] sm:$0xc] %vm21, %v20
    %s25 = scalar_lea.vmem [#allocation1], 2
    %v26 = vld [vmem:[%s25] ss:$8 sm:$0xf]
    %27 = vrot.lane.b32.xlu0 %v26, 6
    %v28 = vpop.permute.xlu0 %27
    %vm29 = vcmask 72752
    %30 = vst.msk [vmem:[#allocation0] sm:$0x3] %vm29, %v28
    %s31 = scalar_lea.vmem [#allocation0], 6
    %32 = vst.msk [vmem:[%s31] sm:$0xc] %vm29, %v28
    %s33 = scalar_lea.vmem [#allocation1], 1
    %v34 = vld [vmem:[%s33] ss:$8 sm:$0xf]
    %35 = vrot.lane.b32.xlu0 %v34, 3
    %v36 = vpop.permute.xlu0 %35
    %vm37 = vcmask 48152
    %38 = vst.msk [vmem:[#allocation0] sm:$0x3] %vm37, %v36
    %s39 = scalar_lea.vmem [#allocation0], 6
    %40 = vst.msk [vmem:[%s39] sm:$0xc] %vm37, %v36
    %s42 = sshllo.u32 0, 2
    %v44 = vld [vmem:[#allocation0] sm:%s42]
    %s45 = sshllo.u32 0, 2
    %46 = vst [vmem:[%s1] sm:%s45] %v44
    %s47 = scalar_lea.vmem [#allocation0], 8
    %v48 = vld [vmem:[%s47] sm:%s42]
    %s49 = sshllo.u32 0, 2
    %s50 = scalar_lea.vmem %s1, 2
    %51 = vst [vmem:[%s50] sm:%s49] %v48

// kernel: sub.44
$region0: #{sub.44}
  %s0 = inlined_call_operand.vmem [shape: f32[8,8,2], index: 0, kind: input, shape index: {}]
  %s1 = inlined_call_operand.vmem [shape: f32[64,2], index: 1, kind: output, shape index: {}]
  $region1: #{sub.44} parent=0
    #allocation0 [shape = 'u8[4096]{0}', space=vmem, size = 0x1000, scoped, tag = 'scoped mem for output reshape']
    %s2 = smov 3
    %v3 = vld [vmem:[%s0] ss:$8 sm:%s2]
    %vm4 = vcmask 64512
    %5 = vst.msk [vmem:[#allocation0] sm:$0x3] %vm4, %v3
    %s6 = scalar_lea.vmem %s0, 7
    %s7 = smov 3
    %v8 = vld [vmem:[%s6] ss:$8 sm:%s7]
    %9 = vrot.lane.b32.xlu0 %v8, 56
    %v10 = vpop.permute.xlu0 %9
    %vm11 = vcmask 523712
    %12 = vst.msk [vmem:[#allocation0] sm:$0x3] %vm11, %v10
    %s13 = scalar_lea.vmem %s0, 6
    %s14 = smov 3
    %v15 = vld [vmem:[%s13] ss:$8 sm:%s14]
    %16 = vrot.lane.b32.xlu0 %v15, 48
    %v17 = vpop.permute.xlu0 %16
    %vm18 = vcmask 458112
    %19 = vst.msk [vmem:[#allocation0] sm:$0x3] %vm18, %v17
    %s20 = scalar_lea.vmem %s0, 5
    %s21 = smov 3
    %v22 = vld [vmem:[%s20] ss:$8 sm:%s21]
    %23 = vrot.lane.b32.xlu0 %v22, 40
    %v24 = vpop.permute.xlu0 %23
    %vm25 = vcmask 392512
    %26 = vst.msk [vmem:[#allocation0] sm:$0x3] %vm25, %v24
    %s27 = scalar_lea.vmem %s0, 4
    %s28 = smov 3
    %v29 = vld [vmem:[%s27] ss:$8 sm:%s28]
    %30 = vrot.lane.b32.xlu0 %v29, 32
    %v31 = vpop.permute.xlu0 %30
    %vm32 = vcmask 326912
    %33 = vst.msk [vmem:[#allocation0] sm:$0x3] %vm32, %v31
    %s34 = scalar_lea.vmem %s0, 3
    %s35 = smov 3
    %v36 = vld [vmem:[%s34] ss:$8 sm:%s35]
    %37 = vrot.lane.b32.xlu0 %v36, 24
    %v38 = vpop.permute.xlu0 %37
    %vm39 = vcmask 261312
    %40 = vst.msk [vmem:[#allocation0] sm:$0x3] %vm39, %v38
    %s41 = scalar_lea.vmem %s0, 2
    %s42 = smov 3
    %v43 = vld [vmem:[%s41] ss:$8 sm:%s42]
    %44 = vrot.lane.b32.xlu0 %v43, 16
    %v45 = vpop.permute.xlu0 %44
    %vm46 = vcmask 195712
    %47 = vst.msk [vmem:[#allocation0] sm:$0x3] %vm46, %v45
    %s48 = scalar_lea.vmem %s0, 1
    %s49 = smov 3
    %v50 = vld [vmem:[%s48] ss:$8 sm:%s49]
    %51 = vrot.lane.b32.xlu0 %v50, 8
    %v52 = vpop.permute.xlu0 %51
    %vm53 = vcmask 130112
    %54 = vst.msk [vmem:[#allocation0] sm:$0x3] %vm53, %v52
    %s56 = sshllo.u32 0, 2
    %v58 = vld [vmem:[#allocation0] sm:%s56]
    %s59 = sshllo.u32 0, 2
    %60 = vst [vmem:[%s1] sm:%s59] %v58

// kernel: run.2
$region0: #{run.2}
  #allocation0 [shape = 'u32[]', space=smem, size = 0x4, offset = 0x4, fixed_abs, tag = 'smem constant byte address 0x4 - core index']
  #allocation1 [shape = 'u32[144,128]{1,0:T(1,128)}', space=vmem, size = 0x12000, scoped, tag = 'internal scratch']
  %s0 = inlined_call_operand.vmem [shape: bf16[16,128], index: 0, kind: input, shape index: {}]
  %s1 = inlined_call_operand.vmem [shape: bf16[16,16], index: 1, kind: input, shape index: {}]
  %s2 = inlined_call_operand.vmem [shape: f32[16,1], index: 2, kind: input, shape index: {}]
  %s3 = inlined_call_operand.vmem [shape: f32[16,128], index: 3, kind: output, shape index: {}]
  %s4 = sld [smem:[#allocation0]]
  $region22: #{run.2} parent=0
    _
  %s6 = ssub.s32 1, %s4
  %s7 = scalar_select 0, %s6, %s4
  // Predicated region
  $region2: #{run.2} parent=0 // pred_check
    _
  $region3: #{run.2} parent=0 // pred_check_branch
    %9 = sbr.rel (0) target = $region5
  $region4: #{run.2} parent=0 // pred_region
    _
  $region5: #{run.2} parent=0 // pred_fallthru
    _
  // Predicated region
  $region6: #{run.2} parent=0 // pred_check
    _
  $region7: #{run.2} parent=0 // pred_check_branch
    %11 = sbr.rel (0) target = $region9
  $region8: #{run.2} parent=0 // pred_region
    _
  $region9: #{run.2} parent=0 // pred_fallthru
    _
  // Predicated region
  $region10: #{run.2} parent=0 // pred_check
    _
  $region11: #{run.2} parent=0 // pred_check_branch
    %13 = sbr.rel (0) target = $region13
  $region12: #{run.2} parent=0 // pred_region
    _
  $region13: #{run.2} parent=0 // pred_fallthru
    _
  %v15 = vld [vmem:[%s1] sm:$0xf]
  %v16 = vld [vmem:[%s1 + $0x4] sm:$0xf]
  %v17 = vld [vmem:[%s0] sm:$0xf]
  %v18 = vld [vmem:[%s0 + $0x4] sm:$0xf]
  %v19 = vld [vmem:[%s2] sm:$0xff]
  %v20 = vld [vmem:[%s2 + $0x8] sm:$0xff]
  %22 = vset.pattern.permute.xlu0 0
  %23 = vperm.xlu0 %22, %v19
  %v24 = vpop.permute.xlu0 %23
  %27 = vset.pattern.permute.xlu0 0
  %28 = vperm.xlu0 %27, %v20
  %v29 = vpop.permute.xlu0 %28
  %v33 = vunpack.c.l.b16 %v15
  %v34 = vunpack.c.l.b16 %v16
  %v35 = vpack.c.b16 %v34, %v33
  %v38 = vunpack.c.l.b16 %v17
  %v39 = vunpack.c.l.b16 %v18
  %v40 = vpack.c.b16 %v39, %v38
  %vm42 = vcmask 130048
  %v44 = vsel %vm42, %v35, 0
  %46 = vmatprep.subr.bf16.mxu0 0
  %47 = vmatpush1.bf16.msra.mxu0 %v40
  %48 = vmatprep.subr.bf16.mxu0 0
  %49 = vmatpush1.bf16.msra.mxu0 0
  %50 = vmatprep.subr.bf16.mxu0 0
  %51 = vmatpush1.bf16.msra.mxu0 0
  %52 = vmatprep.subr.bf16.mxu0 0
  %53 = vmatpush1.bf16.msra.mxu0 0
  %54 = vmatprep.subr.bf16.mxu0 0
  %55 = vmatpush1.bf16.msra.mxu0 0
  %56 = vmatprep.subr.bf16.mxu0 0
  %57 = vmatpush1.bf16.msra.mxu0 0
  %58 = vmatprep.subr.bf16.mxu0 0
  %59 = vmatpush1.bf16.msra.mxu0 0
  %60 = vmatprep.subr.bf16.mxu0 0
  %61 = vmatpush1.bf16.msra.mxu0 0
  %62 = vmatprep.subr.bf16.mxu0 0
  %63 = vmatpush1.bf16.msra.mxu0 0
  %64 = vmatprep.subr.bf16.mxu0 0
  %65 = vmatpush1.bf16.msra.mxu0 0
  %66 = vmatprep.subr.bf16.mxu0 0
  %67 = vmatpush1.bf16.msra.mxu0 0
  %68 = vmatprep.subr.bf16.mxu0 0
  %69 = vmatpush1.bf16.msra.mxu0 0
  %70 = vmatprep.subr.bf16.mxu0 0
  %71 = vmatpush1.bf16.msra.mxu0 0
  %72 = vmatprep.subr.bf16.mxu0 0
  %73 = vmatpush1.bf16.msra.mxu0 0
  %74 = vmatprep.subr.bf16.mxu0 0
  %75 = vmatpush1.bf16.msra.mxu0 0
  %76 = vmatprep.subr.bf16.mxu0 0
  %77 = vmatpush1.bf16.msra.mxu0 0
  %78 = vmatprep.mubr.bf16.mxu0 0
  %79 = vmatmul.mubr.bf16.gmra.mrb[0].mxu0 %v44
  %v80 = vpop.f32.mrb[0].mxu0
  %v81 = vadd.f32 %v24, %v80
  %v82 = vpop.f32.mrb[0].mxu0
  %v83 = vpop.f32.mrb[0].mxu0
  %v84 = vadd.f32 %v29, %v83
  %v85 = vpop.f32.mrb[0].mxu0
  %86 = vdwg.mxu0
  %87 = vst [vmem:[%s3] sm:$0xff] %v81
  %88 = vst [vmem:[%s3 + $0x8] sm:$0xff] %v84
  // Predicated region
  $region14: #{run.2} parent=0 // pred_check
    _
  $region15: #{run.2} parent=0 // pred_check_branch
    %90 = sbr.rel (0) target = $region17
  $region16: #{run.2} parent=0 // pred_region
    _
  $region17: #{run.2} parent=0 // pred_fallthru
    _
  // Predicated region
  $region18: #{run.2} parent=0 // pred_check
    _
  $region19: #{run.2} parent=0 // pred_check_branch
    %92 = sbr.rel (0) target = $region21
  $region20: #{run.2} parent=0 // pred_region
    _
  $region21: #{run.2} parent=0 // pred_fallthru
    _

// kernel: run.3
$region0: #{run.3}
  #allocation0 [shape = 'u32[]', space=smem, size = 0x4, offset = 0x4, fixed_abs, tag = 'smem constant byte address 0x4 - core index']
  #allocation1 [shape = 'u32[144,128]{1,0:T(1,128)}', space=vmem, size = 0x12000, scoped, tag = 'internal scratch']
  %s0 = inlined_call_operand.vmem [shape: bf16[2,64,16], index: 0, kind: input, shape index: {}]
  %s1 = inlined_call_operand.vmem [shape: bf16[2,16,9], index: 1, kind: input, shape index: {}]
  %s2 = inlined_call_operand.vmem [shape: f32[2,64,36], index: 2, kind: input, shape index: {}]
  %s3 = inlined_call_operand.vmem [shape: f32[16,36], index: 3, kind: input, shape index: {}]
  %s4 = inlined_call_operand.vmem [shape: bf16[16,16], index: 4, kind: input, shape index: {}]
  %s5 = inlined_call_operand.vmem [shape: f32[16,1], index: 5, kind: input, shape index: {}, may-alias: {5,7,9}]
  %s6 = inlined_call_operand.vmem [shape: bf16[16,16], index: 6, kind: input, shape index: {}]
  %s7 = inlined_call_operand.vmem [shape: f32[16,1], index: 7, kind: input, shape index: {}, may-alias: {5,7,9}]
  %s8 = inlined_call_operand.vmem [shape: bf16[16,16], index: 8, kind: input, shape index: {}]
  %s9 = inlined_call_operand.vmem [shape: f32[16,1], index: 9, kind: input, shape index: {}, may-alias: {5,7,9}]
  %s10 = inlined_call_operand.vmem [shape: f32[2,16,64], index: 10, kind: output, shape index: {}]
  %s11 = sld [smem:[#allocation0]]
  $region73: #{run.3} parent=0
    _
  %s13 = ssub.s32 1, %s11
  %s14 = scalar_select 0, %s13, %s11
  loop: start=0, step=1, limit=4
  $region2: #{run.3} parent=0 // loop_pre_header
    _
  $region3: #{run.3} parent=0 // loop_header
    %s16 = sphi 0, %s20
    %p17 = scmp.ge.s32.totalorder %s16, 4
    %s26 = sphi 0, %s28
    %s29 = sphi 0, %s26
    %s30 = sphi 0, %s29
    %s46 = sphi 0, %s30
    %s52 = sphi 0, %s54
    %s55 = sphi 0, %s52
    %s56 = sphi 0, %s55
    %s72 = sphi 0, %s56
    %s78 = sphi 0, %s80
    %s81 = sphi 0, %s78
    %s82 = sphi 0, %s81
    %s98 = sphi 0, %s82
    %s102 = sphi 0, %s102
    %s104 = sphi 0, %s102
    %s105 = sphi 0, %s104
    %s119 = sphi 0, %s105
    %s123 = sphi 0, %s123
    %s125 = sphi 0, %s123
    %s126 = sphi 0, %s125
    %s140 = sphi 0, %s126
    %s144 = sphi 0, %s144
    %s146 = sphi 0, %s144
    %s147 = sphi 0, %s146
    %s161 = sphi 0, %s147
    %s165 = sphi 0, %s165
    %s167 = sphi 0, %s165
    %s168 = sphi 0, %s167
    %s182 = sphi 0, %s168
    %s186 = sphi 0, %s186
    %s188 = sphi 0, %s186
    %s189 = sphi 0, %s188
    %s203 = sphi 0, %s189
    %s207 = sphi 0, %s207
    %s209 = sphi 0, %s207
    %s210 = sphi 0, %s209
    %s224 = sphi 0, %s210
    %s228 = sphi 0, %s228
    %s230 = sphi 0, %s228
    %s231 = sphi 0, %s230
    %s245 = sphi 0, %s231
    %s251 = sphi 0, %s253
    %s254 = sphi 0, %s251
    %s255 = sphi 0, %s254
    %s271 = sphi 0, %s255
  $region4: #{run.3} parent=0 // loop_header_branch
    %19 = sbr.rel (%p17) target = $region8
  $region5: #{run.3} parent=0 // loop_body
    %s21 = ssub.s32 %s16, 1
    %s22 = ssub.s32 %s16, 2
    %s23 = sadd.s32 %s16, 1
    %s24 = ssub.s32 %s16, %s23
    %p25 = scmp.eq.s32.totalorder %s24, 0
    %s27 = sadd.s32 %s26, 1
    %s28 = scalar_select %p25, %s26, %s27
    %p31 = pneg %p25
    %p32 = scmp.eq.s32.totalorder %s16, 1
    %p33 = por %p31, %p32
    %p34 = scmp.ne.s32.totalorder %s26, %s29
    %p35 = scmp.eq.s32.totalorder %s16, 0
    %p36 = por %p34, %p35
    %p37 = scmp.ne.s32.totalorder %s26, %s29
    %p38 = scmp.eq.s32.totalorder %s21, 1
    %p39 = por %p37, %p38
    %p40 = scmp.ne.s32.totalorder %s29, %s30
    %p41 = scmp.eq.s32.totalorder %s21, 0
    %p42 = por %p40, %p41
    %p43 = scmp.ne.s32.totalorder %s29, %s30
    %p44 = scmp.eq.s32.totalorder %s22, 1
    %p45 = por %p43, %p44
    %p47 = scmp.ne.s32.totalorder %s30, %s46
    %p48 = scmp.eq.s32.totalorder %s22, 0
    %p49 = por %p47, %p48
    %s50 = ssub.s32 %s16, %s23
    %p51 = scmp.eq.s32.totalorder %s50, 0
    %s53 = sadd.s32 %s52, 1
    %s54 = scalar_select %p51, %s52, %s53
    %p57 = pneg %p51
    %p58 = scmp.eq.s32.totalorder %s16, 1
    %p59 = por %p57, %p58
    %p60 = scmp.ne.s32.totalorder %s52, %s55
    %p61 = scmp.eq.s32.totalorder %s16, 0
    %p62 = por %p60, %p61
    %p63 = scmp.ne.s32.totalorder %s52, %s55
    %p64 = scmp.eq.s32.totalorder %s21, 1
    %p65 = por %p63, %p64
    %p66 = scmp.ne.s32.totalorder %s55, %s56
    %p67 = scmp.eq.s32.totalorder %s21, 0
    %p68 = por %p66, %p67
    %p69 = scmp.ne.s32.totalorder %s55, %s56
    %p70 = scmp.eq.s32.totalorder %s22, 1
    %p71 = por %p69, %p70
    %p73 = scmp.ne.s32.totalorder %s56, %s72
    %p74 = scmp.eq.s32.totalorder %s22, 0
    %p75 = por %p73, %p74
    %s76 = ssub.s32 %s16, %s23
    %p77 = scmp.eq.s32.totalorder %s76, 0
    %s79 = sadd.s32 %s78, 1
    %s80 = scalar_select %p77, %s78, %s79
    %p83 = pneg %p77
    %p84 = scmp.eq.s32.totalorder %s16, 1
    %p85 = por %p83, %p84
    %p86 = scmp.ne.s32.totalorder %s78, %s81
    %p87 = scmp.eq.s32.totalorder %s16, 0
    %p88 = por %p86, %p87
    %p89 = scmp.ne.s32.totalorder %s78, %s81
    %p90 = scmp.eq.s32.totalorder %s21, 1
    %p91 = por %p89, %p90
    %p92 = scmp.ne.s32.totalorder %s81, %s82
    %p93 = scmp.eq.s32.totalorder %s21, 0
    %p94 = por %p92, %p93
    %p95 = scmp.ne.s32.totalorder %s81, %s82
    %p96 = scmp.eq.s32.totalorder %s22, 1
    %p97 = por %p95, %p96
    %p99 = scmp.ne.s32.totalorder %s82, %s98
    %p100 = scmp.eq.s32.totalorder %s22, 0
    %p101 = por %p99, %p100
    %s103 = sadd.s32 %s102, 1
    %p106 = scmp.eq.s32.totalorder %s16, 1
    %p107 = scmp.ne.s32.totalorder %s102, %s104
    %p108 = scmp.eq.s32.totalorder %s16, 0
    %p109 = por %p107, %p108
    %p110 = scmp.ne.s32.totalorder %s102, %s104
    %p111 = scmp.eq.s32.totalorder %s21, 1
    %p112 = por %p110, %p111
    %p113 = scmp.ne.s32.totalorder %s104, %s105
    %p114 = scmp.eq.s32.totalorder %s21, 0
    %p115 = por %p113, %p114
    %p116 = scmp.ne.s32.totalorder %s104, %s105
    %p117 = scmp.eq.s32.totalorder %s22, 1
    %p118 = por %p116, %p117
    %p120 = scmp.ne.s32.totalorder %s105, %s119
    %p121 = scmp.eq.s32.totalorder %s22, 0
    %p122 = por %p120, %p121
    %s124 = sadd.s32 %s123, 1
    %p127 = scmp.eq.s32.totalorder %s16, 1
    %p128 = scmp.ne.s32.totalorder %s123, %s125
    %p129 = scmp.eq.s32.totalorder %s16, 0
    %p130 = por %p128, %p129
    %p131 = scmp.ne.s32.totalorder %s123, %s125
    %p132 = scmp.eq.s32.totalorder %s21, 1
    %p133 = por %p131, %p132
    %p134 = scmp.ne.s32.totalorder %s125, %s126
    %p135 = scmp.eq.s32.totalorder %s21, 0
    %p136 = por %p134, %p135
    %p137 = scmp.ne.s32.totalorder %s125, %s126
    %p138 = scmp.eq.s32.totalorder %s22, 1
    %p139 = por %p137, %p138
    %p141 = scmp.ne.s32.totalorder %s126, %s140
    %p142 = scmp.eq.s32.totalorder %s22, 0
    %p143 = por %p141, %p142
    %s145 = sadd.s32 %s144, 1
    %p148 = scmp.eq.s32.totalorder %s16, 1
    %p149 = scmp.ne.s32.totalorder %s144, %s146
    %p150 = scmp.eq.s32.totalorder %s16, 0
    %p151 = por %p149, %p150
    %p152 = scmp.ne.s32.totalorder %s144, %s146
    %p153 = scmp.eq.s32.totalorder %s21, 1
    %p154 = por %p152, %p153
    %p155 = scmp.ne.s32.totalorder %s146, %s147
    %p156 = scmp.eq.s32.totalorder %s21, 0
    %p157 = por %p155, %p156
    %p158 = scmp.ne.s32.totalorder %s146, %s147
    %p159 = scmp.eq.s32.totalorder %s22, 1
    %p160 = por %p158, %p159
    %p162 = scmp.ne.s32.totalorder %s147, %s161
    %p163 = scmp.eq.s32.totalorder %s22, 0
    %p164 = por %p162, %p163
    %s166 = sadd.s32 %s165, 1
    %p169 = scmp.eq.s32.totalorder %s16, 1
    %p170 = scmp.ne.s32.totalorder %s165, %s167
    %p171 = scmp.eq.s32.totalorder %s16, 0
    %p172 = por %p170, %p171
    %p173 = scmp.ne.s32.totalorder %s165, %s167
    %p174 = scmp.eq.s32.totalorder %s21, 1
    %p175 = por %p173, %p174
    %p176 = scmp.ne.s32.totalorder %s167, %s168
    %p177 = scmp.eq.s32.totalorder %s21, 0
    %p178 = por %p176, %p177
    %p179 = scmp.ne.s32.totalorder %s167, %s168
    %p180 = scmp.eq.s32.totalorder %s22, 1
    %p181 = por %p179, %p180
    %p183 = scmp.ne.s32.totalorder %s168, %s182
    %p184 = scmp.eq.s32.totalorder %s22, 0
    %p185 = por %p183, %p184
    %s187 = sadd.s32 %s186, 1
    %p190 = scmp.eq.s32.totalorder %s16, 1
    %p191 = scmp.ne.s32.totalorder %s186, %s188
    %p192 = scmp.eq.s32.totalorder %s16, 0
    %p193 = por %p191, %p192
    %p194 = scmp.ne.s32.totalorder %s186, %s188
    %p195 = scmp.eq.s32.totalorder %s21, 1
    %p196 = por %p194, %p195
    %p197 = scmp.ne.s32.totalorder %s188, %s189
    %p198 = scmp.eq.s32.totalorder %s21, 0
    %p199 = por %p197, %p198
    %p200 = scmp.ne.s32.totalorder %s188, %s189
    %p201 = scmp.eq.s32.totalorder %s22, 1
    %p202 = por %p200, %p201
    %p204 = scmp.ne.s32.totalorder %s189, %s203
    %p205 = scmp.eq.s32.totalorder %s22, 0
    %p206 = por %p204, %p205
    %s208 = sadd.s32 %s207, 1
    %p211 = scmp.eq.s32.totalorder %s16, 1
    %p212 = scmp.ne.s32.totalorder %s207, %s209
    %p213 = scmp.eq.s32.totalorder %s16, 0
    %p214 = por %p212, %p213
    %p215 = scmp.ne.s32.totalorder %s207, %s209
    %p216 = scmp.eq.s32.totalorder %s21, 1
    %p217 = por %p215, %p216
    %p218 = scmp.ne.s32.totalorder %s209, %s210
    %p219 = scmp.eq.s32.totalorder %s21, 0
    %p220 = por %p218, %p219
    %p221 = scmp.ne.s32.totalorder %s209, %s210
    %p222 = scmp.eq.s32.totalorder %s22, 1
    %p223 = por %p221, %p222
    %p225 = scmp.ne.s32.totalorder %s210, %s224
    %p226 = scmp.eq.s32.totalorder %s22, 0
    %p227 = por %p225, %p226
    %s229 = sadd.s32 %s228, 1
    %p232 = scmp.eq.s32.totalorder %s16, 1
    %p233 = scmp.ne.s32.totalorder %s228, %s230
    %p234 = scmp.eq.s32.totalorder %s16, 0
    %p235 = por %p233, %p234
    %p236 = scmp.ne.s32.totalorder %s228, %s230
    %p237 = scmp.eq.s32.totalorder %s21, 1
    %p238 = por %p236, %p237
    %p239 = scmp.ne.s32.totalorder %s230, %s231
    %p240 = scmp.eq.s32.totalorder %s21, 0
    %p241 = por %p239, %p240
    %p242 = scmp.ne.s32.totalorder %s230, %s231
    %p243 = scmp.eq.s32.totalorder %s22, 1
    %p244 = por %p242, %p243
    %p246 = scmp.ne.s32.totalorder %s231, %s245
    %p247 = scmp.eq.s32.totalorder %s22, 0
    %p248 = por %p246, %p247
    %s249 = ssub.s32 %s16, %s23
    %p250 = scmp.eq.s32.totalorder %s249, 0
    %s252 = sadd.s32 %s251, 1
    %s253 = scalar_select %p250, %s251, %s252
    %p256 = pneg %p250
    %p257 = scmp.eq.s32.totalorder %s16, 1
    %p258 = por %p256, %p257
    %p259 = scmp.ne.s32.totalorder %s251, %s254
    %p260 = scmp.eq.s32.totalorder %s16, 0
    %p261 = por %p259, %p260
    %p262 = scmp.ne.s32.totalorder %s251, %s254
    %p263 = scmp.eq.s32.totalorder %s21, 1
    %p264 = por %p262, %p263
    %p265 = scmp.ne.s32.totalorder %s254, %s255
    %p266 = scmp.eq.s32.totalorder %s21, 0
    %p267 = por %p265, %p266
    %p268 = scmp.ne.s32.totalorder %s254, %s255
    %p269 = scmp.eq.s32.totalorder %s22, 1
    %p270 = por %p268, %p269
    %p272 = scmp.ne.s32.totalorder %s255, %s271
    %p273 = scmp.eq.s32.totalorder %s22, 0
    %p274 = por %p272, %p273
    %p275 = scmp.le.s32.totalorder 1, %s16
    %p276 = scmp.lt.s32.totalorder %s16, 3
    %p277 = pnand %p275, %p276
    %p278 = pneg %p277
    // Predicated region
    $region9: #{run.3} parent=5 // pred_check
      _
    $region10: #{run.3} parent=5 // pred_check_branch
      %280 = sbr.rel (%p277) target = $region12
    $region11: #{run.3} parent=5 // pred_region
      %s281 = ssub.s32 %s16, 1
      // Predicated region
      $region13: #{run.3} parent=11 // pred_check
        %p282 = pneg %p115
      $region14: #{run.3} parent=11 // pred_check_branch
        %284 = sbr.rel (%p282) target = $region16
      $region15: #{run.3} parent=11 // pred_region
        _
      $region16: #{run.3} parent=11 // pred_fallthru
        _
      // Predicated region
      $region17: #{run.3} parent=11 // pred_check
        %p285 = pneg %p136
      $region18: #{run.3} parent=11 // pred_check_branch
        %287 = sbr.rel (%p285) target = $region20
      $region19: #{run.3} parent=11 // pred_region
        _
      $region20: #{run.3} parent=11 // pred_fallthru
        _
      // Predicated region
      $region21: #{run.3} parent=11 // pred_check
        %p288 = pneg %p157
      $region22: #{run.3} parent=11 // pred_check_branch
        %290 = sbr.rel (%p288) target = $region24
      $region23: #{run.3} parent=11 // pred_region
        _
      $region24: #{run.3} parent=11 // pred_fallthru
        _
      // Predicated region
      $region25: #{run.3} parent=11 // pred_check
        %p291 = pneg %p178
      $region26: #{run.3} parent=11 // pred_check_branch
        %293 = sbr.rel (%p291) target = $region28
      $region27: #{run.3} parent=11 // pred_region
        _
      $region28: #{run.3} parent=11 // pred_fallthru
        _
      // Predicated region
      $region29: #{run.3} parent=11 // pred_check
        %p294 = pneg %p199
      $region30: #{run.3} parent=11 // pred_check_branch
        %296 = sbr.rel (%p294) target = $region32
      $region31: #{run.3} parent=11 // pred_region
        _
      $region32: #{run.3} parent=11 // pred_fallthru
        _
      // Predicated region
      $region33: #{run.3} parent=11 // pred_check
        %p297 = pneg %p220
      $region34: #{run.3} parent=11 // pred_check_branch
        %299 = sbr.rel (%p297) target = $region36
      $region35: #{run.3} parent=11 // pred_region
        _
      $region36: #{run.3} parent=11 // pred_fallthru
        _
      // Predicated region
      $region37: #{run.3} parent=11 // pred_check
        %p300 = pneg %p241
      $region38: #{run.3} parent=11 // pred_check_branch
        %302 = sbr.rel (%p300) target = $region40
      $region39: #{run.3} parent=11 // pred_region
        _
      $region40: #{run.3} parent=11 // pred_fallthru
        _
    $region12: #{run.3} parent=5 // pred_fallthru
      _
    %p303 = scmp.lt.s32.totalorder %s16, 2
    // Predicated region
    $region41: #{run.3} parent=5 // pred_check
      %p304 = pneg %p303
    $region42: #{run.3} parent=5 // pred_check_branch
      %306 = sbr.rel (%p304) target = $region44
    $region43: #{run.3} parent=5 // pred_region
      // Predicated region
      $region45: #{run.3} parent=43 // pred_check
        %p307 = pneg %p36
      $region46: #{run.3} parent=43 // pred_check_branch
        %309 = sbr.rel (%p307) target = $region48
      $region47: #{run.3} parent=43 // pred_region
        %p310 = scmp.lt.s32.totalorder %s16, 1
        %s311 = scalar_select %p310, %s16, 1
        %s312 = smul.addr %s311, 8
        %s313 = smul.addr %s312, 4
        %s314 = scalar_lea.vmem %s0, %s313
      $region48: #{run.3} parent=43 // pred_fallthru
        _
      // Predicated region
      $region49: #{run.3} parent=43 // pred_check
        %p315 = pneg %p62
      $region50: #{run.3} parent=43 // pred_check_branch
        %317 = sbr.rel (%p315) target = $region52
      $region51: #{run.3} parent=43 // pred_region
        %p318 = scmp.lt.s32.totalorder %s16, 1
        %s319 = scalar_select %p318, %s16, 1
        %s320 = smul.addr %s319, 2
        %s321 = smul.addr %s320, 4
        %s322 = scalar_lea.vmem %s1, %s321
      $region52: #{run.3} parent=43 // pred_fallthru
        _
      // Predicated region
      $region53: #{run.3} parent=43 // pred_check
        %p323 = pneg %p88
      $region54: #{run.3} parent=43 // pred_check_branch
        %325 = sbr.rel (%p323) target = $region56
      $region55: #{run.3} parent=43 // pred_region
        %p326 = scmp.lt.s32.totalorder %s16, 1
        %s327 = scalar_select %p326, %s16, 1
        %s328 = smul.addr %s327, 8
        %s329 = smul.addr %s328, 8
        %s330 = scalar_lea.vmem %s2, %s329
      $region56: #{run.3} parent=43 // pred_fallthru
        _
    $region44: #{run.3} parent=5 // pred_fallthru
      _
    %p331 = scmp.le.s32.totalorder 1, %s16
    %p332 = scmp.lt.s32.totalorder %s16, 3
    %p333 = pnand %p331, %p332
    %p334 = pneg %p333
    // Predicated region
    $region57: #{run.3} parent=5 // pred_check
      _
    $region58: #{run.3} parent=5 // pred_check_branch
      %336 = sbr.rel (%p333) target = $region60
    $region59: #{run.3} parent=5 // pred_region
      %s337 = ssub.s32 %s16, 1
      %p338 = scmp.lt.s32.totalorder %s21, 1
      %s339 = scalar_select %p338, %s21, 1
      %s340 = smul.addr %s339, 8
      %s341 = smul.addr %s340, 4
      %s342 = scalar_lea.vmem %s0, %s341
      %p343 = pneg %p42
      %p344 = pneg %p39
      %p345 = scmp.lt.s32.totalorder %s21, 1
      %s346 = scalar_select %p345, %s21, 1
      %s347 = smul.addr %s346, 2
      %s348 = smul.addr %s347, 4
      %s349 = scalar_lea.vmem %s1, %s348
      %p350 = pneg %p68
      %p351 = pneg %p65
      %p352 = scmp.lt.s32.totalorder %s21, 1
      %s353 = scalar_select %p352, %s21, 1
      %s354 = smul.addr %s353, 8
      %s355 = smul.addr %s354, 8
      %s356 = scalar_lea.vmem %s2, %s355
      %p357 = pneg %p94
      %p358 = pneg %p91
      %p359 = pneg %p115
      %p360 = pneg %p112
      %p361 = pneg %p136
      %p362 = pneg %p133
      %p363 = pneg %p157
      %p364 = pneg %p154
      %p365 = pneg %p178
      %p366 = pneg %p175
      %p367 = pneg %p199
      %p368 = pneg %p196
      %p369 = pneg %p220
      %p370 = pneg %p217
      %p371 = pneg %p241
      %p372 = pneg %p238
      %p373 = pneg %p267
      %p374 = pneg %p264
      %p375 = scmp.lt.s32.totalorder %s21, 1
      %s376 = scalar_select %p375, %s21, 1
      %s377 = smul.addr %s376, 2
      %s378 = smul.addr %s377, 8
      %s379 = scalar_lea.vmem %s10, %s378
      %p380 = scmp.lt.s32.totalorder %s21, 1
      %s381 = scalar_select %p380, %s21, 1
      %s382 = smul.addr %s381, 8
      %s383 = smul.addr %s382, 4
      %s384 = scalar_lea.vmem %s0, %s383
      %p385 = scmp.lt.s32.totalorder %s21, 1
      %s386 = scalar_select %p385, %s21, 1
      %s387 = smul.addr %s386, 2
      %s388 = smul.addr %s387, 4
      %s389 = scalar_lea.vmem %s1, %s388
      %p390 = scmp.lt.s32.totalorder %s21, 1
      %s391 = scalar_select %p390, %s21, 1
      %s392 = smul.addr %s391, 8
      %s393 = smul.addr %s392, 8
      %s394 = scalar_lea.vmem %s2, %s393
      %p395 = scmp.lt.s32.totalorder %s21, 1
      %s396 = scalar_select %p395, %s21, 1
      %s397 = smul.addr %s396, 2
      %s398 = smul.addr %s397, 8
      %s399 = scalar_lea.vmem %s10, %s398
      %v401 = vld [vmem:[%s389] sm:$0xf]
      %v402 = vld [vmem:[%s389 + $0x4] sm:$0xf]
      %v403 = vld [vmem:[%s4] sm:$0xf]
      %v404 = vld [vmem:[%s4 + $0x4] sm:$0xf]
      %v405 = vld [vmem:[%s5] sm:$0xff]
      %v406 = vld [vmem:[%s5 + $0x8] sm:$0xff]
      %408 = vset.pattern.permute.xlu0 0
      %409 = vperm.xlu0 %408, %v405
      %v410 = vpop.permute.xlu0 %409
      %413 = vset.pattern.permute.xlu0 0
      %414 = vperm.xlu0 %413, %v406
      %v415 = vpop.permute.xlu0 %414
      %v419 = vunpack.c.l.b16 %v403
      %v420 = vunpack.c.l.b16 %v404
      %v421 = vpack.c.b16 %v420, %v419
      %v424 = vunpack.c.l.b16 %v401
      %v425 = vunpack.c.l.b16 %v402
      %v426 = vpack.c.b16 %v425, %v424
      %vm428 = vcmask 130048
      %v430 = vsel %vm428, %v421, 0
      %432 = vmatprep.subr.bf16.mxu0 0
      %433 = vmatpush1.bf16.msra.mxu0 %v426
      %434 = vmatprep.subr.bf16.mxu0 0
      %435 = vmatpush1.bf16.msra.mxu0 0
      %436 = vmatprep.subr.bf16.mxu0 0
      %437 = vmatpush1.bf16.msra.mxu0 0
      %438 = vmatprep.subr.bf16.mxu0 0
      %439 = vmatpush1.bf16.msra.mxu0 0
      %440 = vmatprep.subr.bf16.mxu0 0
      %441 = vmatpush1.bf16.msra.mxu0 0
      %442 = vmatprep.subr.bf16.mxu0 0
      %443 = vmatpush1.bf16.msra.mxu0 0
      %444 = vmatprep.subr.bf16.mxu0 0
      %445 = vmatpush1.bf16.msra.mxu0 0
      %446 = vmatprep.subr.bf16.mxu0 0
      %447 = vmatpush1.bf16.msra.mxu0 0
      %448 = vmatprep.subr.bf16.mxu0 0
      %449 = vmatpush1.bf16.msra.mxu0 0
      %450 = vmatprep.subr.bf16.mxu0 0
      %451 = vmatpush1.bf16.msra.mxu0 0
      %452 = vmatprep.subr.bf16.mxu0 0
      %453 = vmatpush1.bf16.msra.mxu0 0
      %454 = vmatprep.subr.bf16.mxu0 0
      %455 = vmatpush1.bf16.msra.mxu0 0
      %456 = vmatprep.subr.bf16.mxu0 0
      %457 = vmatpush1.bf16.msra.mxu0 0
      %458 = vmatprep.subr.bf16.mxu0 0
      %459 = vmatpush1.bf16.msra.mxu0 0
      %460 = vmatprep.subr.bf16.mxu0 0
      %461 = vmatpush1.bf16.msra.mxu0 0
      %462 = vmatprep.subr.bf16.mxu0 0
      %463 = vmatpush1.bf16.msra.mxu0 0
      %464 = vmatprep.mubr.bf16.mxu0 0
      %465 = vmatmul.mubr.bf16.gmra.mrb[0].mxu0 %v430
      %v466 = vpop.f32.mrb[0].mxu0
      %v467 = vadd.f32 %v410, %v466
      %v468 = vpop.f32.mrb[0].mxu0
      %v469 = vpop.f32.mrb[0].mxu0
      %v470 = vadd.f32 %v415, %v469
      %v471 = vpop.f32.mrb[0].mxu0
      %472 = vdwg.mxu0
      %v473 = vld [vmem:[%s6] sm:$0xf]
      %v474 = vld [vmem:[%s6 + $0x4] sm:$0xf]
      %v475 = vld [vmem:[%s7] sm:$0xff]
      %v476 = vld [vmem:[%s7 + $0x8] sm:$0xff]
      %478 = vset.pattern.permute.xlu0 0
      %479 = vperm.xlu0 %478, %v475
      %v480 = vpop.permute.xlu0 %479
      %483 = vset.pattern.permute.xlu0 0
      %484 = vperm.xlu0 %483, %v476
      %v485 = vpop.permute.xlu0 %484
      %v489 = vunpack.c.l.b16 %v473
      %v490 = vunpack.c.l.b16 %v474
      %v491 = vpack.c.b16 %v490, %v489
      %v493 = vsel %vm428, %v491, 0
      %495 = vmatprep.subr.bf16.mxu0 0
      %496 = vmatpush1.bf16.msra.mxu0 %v426
      %497 = vmatprep.subr.bf16.mxu0 0
      %498 = vmatpush1.bf16.msra.mxu0 0
      %499 = vmatprep.subr.bf16.mxu0 0
      %500 = vmatpush1.bf16.msra.mxu0 0
      %501 = vmatprep.subr.bf16.mxu0 0
      %502 = vmatpush1.bf16.msra.mxu0 0
      %503 = vmatprep.subr.bf16.mxu0 0
      %504 = vmatpush1.bf16.msra.mxu0 0
      %505 = vmatprep.subr.bf16.mxu0 0
      %506 = vmatpush1.bf16.msra.mxu0 0
      %507 = vmatprep.subr.bf16.mxu0 0
      %508 = vmatpush1.bf16.msra.mxu0 0
      %509 = vmatprep.subr.bf16.mxu0 0
      %510 = vmatpush1.bf16.msra.mxu0 0
      %511 = vmatprep.subr.bf16.mxu0 0
      %512 = vmatpush1.bf16.msra.mxu0 0
      %513 = vmatprep.subr.bf16.mxu0 0
      %514 = vmatpush1.bf16.msra.mxu0 0
      %515 = vmatprep.subr.bf16.mxu0 0
      %516 = vmatpush1.bf16.msra.mxu0 0
      %517 = vmatprep.subr.bf16.mxu0 0
      %518 = vmatpush1.bf16.msra.mxu0 0
      %519 = vmatprep.subr.bf16.mxu0 0
      %520 = vmatpush1.bf16.msra.mxu0 0
      %521 = vmatprep.subr.bf16.mxu0 0
      %522 = vmatpush1.bf16.msra.mxu0 0
      %523 = vmatprep.subr.bf16.mxu0 0
      %524 = vmatpush1.bf16.msra.mxu0 0
      %525 = vmatprep.subr.bf16.mxu0 0
      %526 = vmatpush1.bf16.msra.mxu0 0
      %527 = vmatprep.mubr.bf16.mxu0 0
      %528 = vmatmul.mubr.bf16.gmra.mrb[0].mxu0 %v493
      %v529 = vpop.f32.mrb[0].mxu0
      %v530 = vadd.f32 %v480, %v529
      %v531 = vpop.f32.mrb[0].mxu0
      %v532 = vpop.f32.mrb[0].mxu0
      %v533 = vadd.f32 %v485, %v532
      %v534 = vpop.f32.mrb[0].mxu0
      %535 = vdwg.mxu0
      %v536 = vld [vmem:[%s3] sm:$0xff]
      %v537 = vld [vmem:[%s3 + $0x8] sm:$0xff]
      %540 = vrot.lane.b32.xlu0 %v467, 9
      %v541 = vpop.permute.xlu0 %540
      %542 = vrot.lane.b32.xlu0 %v470, 9
      %v543 = vpop.permute.xlu0 %542
      %546 = vrot.lane.b32.xlu0 %v467, 18
      %v547 = vpop.permute.xlu0 %546
      %548 = vrot.lane.b32.xlu0 %v470, 18
      %v549 = vpop.permute.xlu0 %548
      %552 = vrot.lane.b32.xlu0 %v467, 27
      %v553 = vpop.permute.xlu0 %552
      %554 = vrot.lane.b32.xlu0 %v470, 27
      %v555 = vpop.permute.xlu0 %554
      %vm558 = vcmask 72704
      %v559 = vsel %vm558, %v467, %v541
      %v560 = vsel %vm558, %v470, %v543
      %vm561 = vcmask 146432
      %v562 = vsel %vm561, %v559, %v547
      %v563 = vsel %vm561, %v560, %v549
      %vm564 = vcmask 220160
      %v565 = vsel %vm564, %v562, %v553
      %v566 = vsel %vm564, %v563, %v555
      %v567 = vmul.f32 %v565, %v536
      %v568 = vmul.f32 %v566, %v537
      %v569 = vpack.c.bf16 %v568, %v567
      %572 = vrot.lane.b32.xlu0 %v530, 9
      %v573 = vpop.permute.xlu0 %572
      %574 = vrot.lane.b32.xlu0 %v533, 9
      %v575 = vpop.permute.xlu0 %574
      %578 = vrot.lane.b32.xlu0 %v530, 18
      %v579 = vpop.permute.xlu0 %578
      %580 = vrot.lane.b32.xlu0 %v533, 18
      %v581 = vpop.permute.xlu0 %580
      %584 = vrot.lane.b32.xlu0 %v530, 27
      %v585 = vpop.permute.xlu0 %584
      %586 = vrot.lane.b32.xlu0 %v533, 27
      %v587 = vpop.permute.xlu0 %586
      %v590 = vsel %vm558, %v530, %v573
      %v591 = vsel %vm558, %v533, %v575
      %v592 = vsel %vm561, %v590, %v579
      %v593 = vsel %vm561, %v591, %v581
      %v594 = vsel %vm564, %v592, %v585
      %v595 = vsel %vm564, %v593, %v587
      %v596 = vmul.f32 %v594, %v536
      %v597 = vmul.f32 %v595, %v537
      %v598 = vpack.c.bf16 %v597, %v596
      %v599 = vld [vmem:[%s384] sm:$0xf]
      %v600 = vld [vmem:[%s384 + $0x4] sm:$0xf]
      %v601 = vld [vmem:[%s384 + $0x8] sm:$0xf]
      %v602 = vld [vmem:[%s384 + $0xc] sm:$0xf]
      %v603 = vld [vmem:[%s384 + $0x10] sm:$0xf]
      %v604 = vld [vmem:[%s384 + $0x14] sm:$0xf]
      %v605 = vld [vmem:[%s384 + $0x18] sm:$0xf]
      %v606 = vld [vmem:[%s384 + $0x1c] sm:$0xf]
      %v607 = vld [vmem:[%s394] sm:$0xff]
      %v608 = vld [vmem:[%s394 + $0x8] sm:$0xff]
      %v609 = vld [vmem:[%s394 + $0x10] sm:$0xff]
      %v610 = vld [vmem:[%s394 + $0x18] sm:$0xff]
      %v611 = vld [vmem:[%s394 + $0x20] sm:$0xff]
      %v612 = vld [vmem:[%s394 + $0x28] sm:$0xff]
      %v613 = vld [vmem:[%s394 + $0x30] sm:$0xff]
      %v614 = vld [vmem:[%s394 + $0x38] sm:$0xff]
      %v623 = vunpack.c.l.b16 %v599
      %v624 = vunpack.c.l.b16 %v600
      %v625 = vunpack.c.l.b16 %v601
      %v626 = vunpack.c.l.b16 %v602
      %v627 = vunpack.c.l.b16 %v603
      %v628 = vunpack.c.l.b16 %v604
      %v629 = vunpack.c.l.b16 %v605
      %v630 = vunpack.c.l.b16 %v606
      %v631 = vpack.c.b16 %v624, %v623
      %v632 = vpack.c.b16 %v626, %v625
      %v633 = vpack.c.b16 %v628, %v627
      %v634 = vpack.c.b16 %v630, %v629
      %v636 = vsel %vm428, %v631, 0
      %v639 = vsel %vm428, %v632, 0
      %v642 = vsel %vm428, %v633, 0
      %v645 = vsel %vm428, %v634, 0
      %647 = vmatprep.subr.bf16.mxu0 0
      %648 = vmatpush1.bf16.msra.mxu0 %v569
      %649 = vmatprep.subr.bf16.mxu0 0
      %650 = vmatpush1.bf16.msra.mxu0 0
      %651 = vmatprep.subr.bf16.mxu0 0
      %652 = vmatpush1.bf16.msra.mxu0 0
      %653 = vmatprep.subr.bf16.mxu0 0
      %654 = vmatpush1.bf16.msra.mxu0 0
      %655 = vmatprep.subr.bf16.mxu0 0
      %656 = vmatpush1.bf16.msra.mxu0 0
      %657 = vmatprep.subr.bf16.mxu0 0
      %658 = vmatpush1.bf16.msra.mxu0 0
      %659 = vmatprep.subr.bf16.mxu0 0
      %660 = vmatpush1.bf16.msra.mxu0 0
      %661 = vmatprep.subr.bf16.mxu0 0
      %662 = vmatpush1.bf16.msra.mxu0 0
      %663 = vmatprep.subr.bf16.mxu0 0
      %664 = vmatpush1.bf16.msra.mxu0 0
      %665 = vmatprep.subr.bf16.mxu0 0
      %666 = vmatpush1.bf16.msra.mxu0 0
      %667 = vmatprep.subr.bf16.mxu0 0
      %668 = vmatpush1.bf16.msra.mxu0 0
      %669 = vmatprep.subr.bf16.mxu0 0
      %670 = vmatpush1.bf16.msra.mxu0 0
      %671 = vmatprep.subr.bf16.mxu0 0
      %672 = vmatpush1.bf16.msra.mxu0 0
      %673 = vmatprep.subr.bf16.mxu0 0
      %674 = vmatpush1.bf16.msra.mxu0 0
      %675 = vmatprep.subr.bf16.mxu0 0
      %676 = vmatpush1.bf16.msra.mxu0 0
      %677 = vmatprep.subr.bf16.mxu0 0
      %678 = vmatpush1.bf16.msra.mxu0 0
      %679 = vmatprep.mubr.bf16.mxu0 0
      %680 = vmatmul.mubr.bf16.gmra.mrb[0].mxu0 %v636
      %v681 = vpop.f32.mrb[0].mxu0
      %v682 = vadd.f32 %v607, %v681
      %v683 = vpop.f32.mrb[0].mxu0
      %v684 = vpop.f32.mrb[0].mxu0
      %v685 = vadd.f32 %v608, %v684
      %v686 = vpop.f32.mrb[0].mxu0
      %687 = vmatprep.mubr.bf16.mxu0 0
      %688 = vmatmul.mubr.bf16.gmra.mrb[0].mxu0 %v639
      %v689 = vpop.f32.mrb[0].mxu0
      %v690 = vadd.f32 %v609, %v689
      %v691 = vpop.f32.mrb[0].mxu0
      %v692 = vpop.f32.mrb[0].mxu0
      %v693 = vadd.f32 %v610, %v692
      %v694 = vpop.f32.mrb[0].mxu0
      %695 = vmatprep.mubr.bf16.mxu0 0
      %696 = vmatmul.mubr.bf16.gmra.mrb[0].mxu0 %v642
      %v697 = vpop.f32.mrb[0].mxu0
      %v698 = vadd.f32 %v611, %v697
      %v699 = vpop.f32.mrb[0].mxu0
      %v700 = vpop.f32.mrb[0].mxu0
      %v701 = vadd.f32 %v612, %v700
      %v702 = vpop.f32.mrb[0].mxu0
      %703 = vmatprep.mubr.bf16.mxu0 0
      %704 = vmatmul.mubr.bf16.gmra.mrb[0].mxu0 %v645
      %v705 = vpop.f32.mrb[0].mxu0
      %v706 = vadd.f32 %v613, %v705
      %v707 = vpop.f32.mrb[0].mxu0
      %v708 = vpop.f32.mrb[0].mxu0
      %v709 = vadd.f32 %v614, %v708
      %v710 = vpop.f32.mrb[0].mxu0
      %711 = vdwg.mxu0
      %v712 = vsel %vm558, %v682, -inf
      %713 = vmax.xlane.f32.xlu0 %v712
      %v714 = vpop.xlane.xlu0 %713
      %v715 = vsel %vm558, %v685, -inf
      %716 = vmax.xlane.f32.xlu0 %v715
      %v717 = vpop.xlane.xlu0 %716
      %v718 = vsel %vm558, %v690, -inf
      %719 = vmax.xlane.f32.xlu0 %v718
      %v720 = vpop.xlane.xlu0 %719
      %v721 = vsel %vm558, %v693, -inf
      %722 = vmax.xlane.f32.xlu0 %v721
      %v723 = vpop.xlane.xlu0 %722
      %v724 = vsel %vm558, %v698, -inf
      %725 = vmax.xlane.f32.xlu0 %v724
      %v726 = vpop.xlane.xlu0 %725
      %v727 = vsel %vm558, %v701, -inf
      %728 = vmax.xlane.f32.xlu0 %v727
      %v729 = vpop.xlane.xlu0 %728
      %v730 = vsel %vm558, %v706, -inf
      %731 = vmax.xlane.f32.xlu0 %v730
      %v732 = vpop.xlane.xlu0 %731
      %v733 = vsel %vm558, %v709, -inf
      %734 = vmax.xlane.f32.xlu0 %v733
      %v735 = vpop.xlane.xlu0 %734
      %v736 = vsub.f32 %v682, %v714
      %v737 = vsub.f32 %v685, %v717
      %v738 = vsub.f32 %v690, %v720
      %v739 = vsub.f32 %v693, %v723
      %v740 = vsub.f32 %v698, %v726
      %v741 = vsub.f32 %v701, %v729
      %v742 = vsub.f32 %v706, %v732
      %v743 = vsub.f32 %v709, %v735
      %v744 = vmul.f32 %v736, 1.442695
      %v745 = vpow.pop %v744
      %v746 = vmul.f32 %v737, 1.442695
      %v747 = vpow.pop %v746
      %v748 = vmul.f32 %v738, 1.442695
      %v749 = vpow.pop %v748
      %v750 = vmul.f32 %v739, 1.442695
      %v751 = vpow.pop %v750
      %v752 = vmul.f32 %v740, 1.442695
      %v753 = vpow.pop %v752
      %v754 = vmul.f32 %v741, 1.442695
      %v755 = vpow.pop %v754
      %v756 = vmul.f32 %v742, 1.442695
      %v757 = vpow.pop %v756
      %v758 = vmul.f32 %v743, 1.442695
      %v759 = vpow.pop %v758
      %v760 = vsel %vm558, %v745, 0.0
      %761 = vadd.xlane.f32.xlu0 %v760
      %v762 = vpop.xlane.xlu0 %761
      %v763 = vsel %vm558, %v747, 0.0
      %764 = vadd.xlane.f32.xlu0 %v763
      %v765 = vpop.xlane.xlu0 %764
      %v766 = vsel %vm558, %v749, 0.0
      %767 = vadd.xlane.f32.xlu0 %v766
      %v768 = vpop.xlane.xlu0 %767
      %v769 = vsel %vm558, %v751, 0.0
      %770 = vadd.xlane.f32.xlu0 %v769
      %v771 = vpop.xlane.xlu0 %770
      %v772 = vsel %vm558, %v753, 0.0
      %773 = vadd.xlane.f32.xlu0 %v772
      %v774 = vpop.xlane.xlu0 %773
      %v775 = vsel %vm558, %v755, 0.0
      %776 = vadd.xlane.f32.xlu0 %v775
      %v777 = vpop.xlane.xlu0 %776
      %v778 = vsel %vm558, %v757, 0.0
      %779 = vadd.xlane.f32.xlu0 %v778
      %v780 = vpop.xlane.xlu0 %779
      %v781 = vsel %vm558, %v759, 0.0
      %782 = vadd.xlane.f32.xlu0 %v781
      %v783 = vpop.xlane.xlu0 %782
      %v784 = vrcp.pop %v762
      %v785 = vrcp.pop %v765
      %v786 = vrcp.pop %v768
      %v787 = vrcp.pop %v771
      %v788 = vrcp.pop %v774
      %v789 = vrcp.pop %v777
      %v790 = vrcp.pop %v780
      %v791 = vrcp.pop %v783
      %v792 = vmul.f32 %v745, %v784
      %v793 = vmul.f32 %v747, %v785
      %v794 = vmul.f32 %v749, %v786
      %v795 = vmul.f32 %v751, %v787
      %v796 = vmul.f32 %v753, %v788
      %v797 = vmul.f32 %v755, %v789
      %v798 = vmul.f32 %v757, %v790
      %v799 = vmul.f32 %v759, %v791
      %vm800 = vcmask 146504
      %v801 = vsel %vm800, %v682, -inf
      %802 = vmax.xlane.f32.xlu0 %v801
      %v803 = vpop.xlane.xlu0 %802
      %v804 = vsel %vm800, %v685, -inf
      %805 = vmax.xlane.f32.xlu0 %v804
      %v806 = vpop.xlane.xlu0 %805
      %v807 = vsel %vm800, %v690, -inf
      %808 = vmax.xlane.f32.xlu0 %v807
      %v809 = vpop.xlane.xlu0 %808
      %v810 = vsel %vm800, %v693, -inf
      %811 = vmax.xlane.f32.xlu0 %v810
      %v812 = vpop.xlane.xlu0 %811
      %v813 = vsel %vm800, %v698, -inf
      %814 = vmax.xlane.f32.xlu0 %v813
      %v815 = vpop.xlane.xlu0 %814
      %v816 = vsel %vm800, %v701, -inf
      %817 = vmax.xlane.f32.xlu0 %v816
      %v818 = vpop.xlane.xlu0 %817
      %v819 = vsel %vm800, %v706, -inf
      %820 = vmax.xlane.f32.xlu0 %v819
      %v821 = vpop.xlane.xlu0 %820
      %v822 = vsel %vm800, %v709, -inf
      %823 = vmax.xlane.f32.xlu0 %v822
      %v824 = vpop.xlane.xlu0 %823
      %v825 = vsub.f32 %v682, %v803
      %v826 = vsub.f32 %v685, %v806
      %v827 = vsub.f32 %v690, %v809
      %v828 = vsub.f32 %v693, %v812
      %v829 = vsub.f32 %v698, %v815
      %v830 = vsub.f32 %v701, %v818
      %v831 = vsub.f32 %v706, %v821
      %v832 = vsub.f32 %v709, %v824
      %v833 = vmul.f32 %v825, 1.442695
      %v834 = vpow.pop %v833
      %v835 = vmul.f32 %v826, 1.442695
      %v836 = vpow.pop %v835
      %v837 = vmul.f32 %v827, 1.442695
      %v838 = vpow.pop %v837
      %v839 = vmul.f32 %v828, 1.442695
      %v840 = vpow.pop %v839
      %v841 = vmul.f32 %v829, 1.442695
      %v842 = vpow.pop %v841
      %v843 = vmul.f32 %v830, 1.442695
      %v844 = vpow.pop %v843
      %v845 = vmul.f32 %v831, 1.442695
      %v846 = vpow.pop %v845
      %v847 = vmul.f32 %v832, 1.442695
      %v848 = vpow.pop %v847
      %857 = vrot.lane.b32.xlu0 %v834, 119
      %v858 = vpop.permute.xlu0 %857
      %859 = vrot.lane.b32.xlu0 %v836, 119
      %v860 = vpop.permute.xlu0 %859
      %861 = vrot.lane.b32.xlu0 %v838, 119
      %v862 = vpop.permute.xlu0 %861
      %863 = vrot.lane.b32.xlu0 %v840, 119
      %v864 = vpop.permute.xlu0 %863
      %865 = vrot.lane.b32.xlu0 %v842, 119
      %v866 = vpop.permute.xlu0 %865
      %867 = vrot.lane.b32.xlu0 %v844, 119
      %v868 = vpop.permute.xlu0 %867
      %869 = vrot.lane.b32.xlu0 %v846, 119
      %v870 = vpop.permute.xlu0 %869
      %871 = vrot.lane.b32.xlu0 %v848, 119
      %v872 = vpop.permute.xlu0 %871
      %v881 = vsel %vm558, %v858, 0.0
      %882 = vadd.xlane.f32.xlu0 %v881
      %v883 = vpop.xlane.xlu0 %882
      %v884 = vsel %vm558, %v860, 0.0
      %885 = vadd.xlane.f32.xlu0 %v884
      %v886 = vpop.xlane.xlu0 %885
      %v887 = vsel %vm558, %v862, 0.0
      %888 = vadd.xlane.f32.xlu0 %v887
      %v889 = vpop.xlane.xlu0 %888
      %v890 = vsel %vm558, %v864, 0.0
      %891 = vadd.xlane.f32.xlu0 %v890
      %v892 = vpop.xlane.xlu0 %891
      %v893 = vsel %vm558, %v866, 0.0
      %894 = vadd.xlane.f32.xlu0 %v893
      %v895 = vpop.xlane.xlu0 %894
      %v896 = vsel %vm558, %v868, 0.0
      %897 = vadd.xlane.f32.xlu0 %v896
      %v898 = vpop.xlane.xlu0 %897
      %v899 = vsel %vm558, %v870, 0.0
      %900 = vadd.xlane.f32.xlu0 %v899
      %v901 = vpop.xlane.xlu0 %900
      %v902 = vsel %vm558, %v872, 0.0
      %903 = vadd.xlane.f32.xlu0 %v902
      %v904 = vpop.xlane.xlu0 %903
      %v905 = vrcp.pop %v883
      %v906 = vrcp.pop %v886
      %v907 = vrcp.pop %v889
      %v908 = vrcp.pop %v892
      %v909 = vrcp.pop %v895
      %v910 = vrcp.pop %v898
      %v911 = vrcp.pop %v901
      %v912 = vrcp.pop %v904
      %v913 = vmul.f32 %v834, %v905
      %v914 = vmul.f32 %v836, %v906
      %v915 = vmul.f32 %v838, %v907
      %v916 = vmul.f32 %v840, %v908
      %v917 = vmul.f32 %v842, %v909
      %v918 = vmul.f32 %v844, %v910
      %v919 = vmul.f32 %v846, %v911
      %v920 = vmul.f32 %v848, %v912
      %vm921 = vcmask 220304
      %v922 = vsel %vm921, %v682, -inf
      %923 = vmax.xlane.f32.xlu0 %v922
      %v924 = vpop.xlane.xlu0 %923
      %v925 = vsel %vm921, %v685, -inf
      %926 = vmax.xlane.f32.xlu0 %v925
      %v927 = vpop.xlane.xlu0 %926
      %v928 = vsel %vm921, %v690, -inf
      %929 = vmax.xlane.f32.xlu0 %v928
      %v930 = vpop.xlane.xlu0 %929
      %v931 = vsel %vm921, %v693, -inf
      %932 = vmax.xlane.f32.xlu0 %v931
      %v933 = vpop.xlane.xlu0 %932
      %v934 = vsel %vm921, %v698, -inf
      %935 = vmax.xlane.f32.xlu0 %v934
      %v936 = vpop.xlane.xlu0 %935
      %v937 = vsel %vm921, %v701, -inf
      %938 = vmax.xlane.f32.xlu0 %v937
      %v939 = vpop.xlane.xlu0 %938
      %v940 = vsel %vm921, %v706, -inf
      %941 = vmax.xlane.f32.xlu0 %v940
      %v942 = vpop.xlane.xlu0 %941
      %v943 = vsel %vm921, %v709, -inf
      %944 = vmax.xlane.f32.xlu0 %v943
      %v945 = vpop.xlane.xlu0 %944
      %v946 = vsub.f32 %v682, %v924
      %v947 = vsub.f32 %v685, %v927
      %v948 = vsub.f32 %v690, %v930
      %v949 = vsub.f32 %v693, %v933
      %v950 = vsub.f32 %v698, %v936
      %v951 = vsub.f32 %v701, %v939
      %v952 = vsub.f32 %v706, %v942
      %v953 = vsub.f32 %v709, %v945
      %v954 = vmul.f32 %v946, 1.442695
      %v955 = vpow.pop %v954
      %v956 = vmul.f32 %v947, 1.442695
      %v957 = vpow.pop %v956
      %v958 = vmul.f32 %v948, 1.442695
      %v959 = vpow.pop %v958
      %v960 = vmul.f32 %v949, 1.442695
      %v961 = vpow.pop %v960
      %v962 = vmul.f32 %v950, 1.442695
      %v963 = vpow.pop %v962
      %v964 = vmul.f32 %v951, 1.442695
      %v965 = vpow.pop %v964
      %v966 = vmul.f32 %v952, 1.442695
      %v967 = vpow.pop %v966
      %v968 = vmul.f32 %v953, 1.442695
      %v969 = vpow.pop %v968
      %978 = vrot.lane.b32.xlu0 %v955, 110
      %v979 = vpop.permute.xlu0 %978
      %980 = vrot.lane.b32.xlu0 %v957, 110
      %v981 = vpop.permute.xlu0 %980
      %982 = vrot.lane.b32.xlu0 %v959, 110
      %v983 = vpop.permute.xlu0 %982
      %984 = vrot.lane.b32.xlu0 %v961, 110
      %v985 = vpop.permute.xlu0 %984
      %986 = vrot.lane.b32.xlu0 %v963, 110
      %v987 = vpop.permute.xlu0 %986
      %988 = vrot.lane.b32.xlu0 %v965, 110
      %v989 = vpop.permute.xlu0 %988
      %990 = vrot.lane.b32.xlu0 %v967, 110
      %v991 = vpop.permute.xlu0 %990
      %992 = vrot.lane.b32.xlu0 %v969, 110
      %v993 = vpop.permute.xlu0 %992
      %v1002 = vsel %vm558, %v979, 0.0
      %1003 = vadd.xlane.f32.xlu0 %v1002
      %v1004 = vpop.xlane.xlu0 %1003
      %v1005 = vsel %vm558, %v981, 0.0
      %1006 = vadd.xlane.f32.xlu0 %v1005
      %v1007 = vpop.xlane.xlu0 %1006
      %v1008 = vsel %vm558, %v983, 0.0
      %1009 = vadd.xlane.f32.xlu0 %v1008
      %v1010 = vpop.xlane.xlu0 %1009
      %v1011 = vsel %vm558, %v985, 0.0
      %1012 = vadd.xlane.f32.xlu0 %v1011
      %v1013 = vpop.xlane.xlu0 %1012
      %v1014 = vsel %vm558, %v987, 0.0
      %1015 = vadd.xlane.f32.xlu0 %v1014
      %v1016 = vpop.xlane.xlu0 %1015
      %v1017 = vsel %vm558, %v989, 0.0
      %1018 = vadd.xlane.f32.xlu0 %v1017
      %v1019 = vpop.xlane.xlu0 %1018
      %v1020 = vsel %vm558, %v991, 0.0
      %1021 = vadd.xlane.f32.xlu0 %v1020
      %v1022 = vpop.xlane.xlu0 %1021
      %v1023 = vsel %vm558, %v993, 0.0
      %1024 = vadd.xlane.f32.xlu0 %v1023
      %v1025 = vpop.xlane.xlu0 %1024
      %v1026 = vrcp.pop %v1004
      %v1027 = vrcp.pop %v1007
      %v1028 = vrcp.pop %v1010
      %v1029 = vrcp.pop %v1013
      %v1030 = vrcp.pop %v1016
      %v1031 = vrcp.pop %v1019
      %v1032 = vrcp.pop %v1022
      %v1033 = vrcp.pop %v1025
      %v1034 = vmul.f32 %v955, %v1026
      %v1035 = vmul.f32 %v957, %v1027
      %v1036 = vmul.f32 %v959, %v1028
      %v1037 = vmul.f32 %v961, %v1029
      %v1038 = vmul.f32 %v963, %v1030
      %v1039 = vmul.f32 %v965, %v1031
      %v1040 = vmul.f32 %v967, %v1032
      %v1041 = vmul.f32 %v969, %v1033
      %vm1042 = vcmask 294104
      %v1043 = vsel %vm1042, %v682, -inf
      %1044 = vmax.xlane.f32.xlu0 %v1043
      %v1045 = vpop.xlane.xlu0 %1044
      %v1046 = vsel %vm1042, %v685, -inf
      %1047 = vmax.xlane.f32.xlu0 %v1046
      %v1048 = vpop.xlane.xlu0 %1047
      %v1049 = vsel %vm1042, %v690, -inf
      %1050 = vmax.xlane.f32.xlu0 %v1049
      %v1051 = vpop.xlane.xlu0 %1050
      %v1052 = vsel %vm1042, %v693, -inf
      %1053 = vmax.xlane.f32.xlu0 %v1052
      %v1054 = vpop.xlane.xlu0 %1053
      %v1055 = vsel %vm1042, %v698, -inf
      %1056 = vmax.xlane.f32.xlu0 %v1055
      %v1057 = vpop.xlane.xlu0 %1056
      %v1058 = vsel %vm1042, %v701, -inf
      %1059 = vmax.xlane.f32.xlu0 %v1058
      %v1060 = vpop.xlane.xlu0 %1059
      %v1061 = vsel %vm1042, %v706, -inf
      %1062 = vmax.xlane.f32.xlu0 %v1061
      %v1063 = vpop.xlane.xlu0 %1062
      %v1064 = vsel %vm1042, %v709, -inf
      %1065 = vmax.xlane.f32.xlu0 %v1064
      %v1066 = vpop.xlane.xlu0 %1065
      %v1067 = vsub.f32 %v682, %v1045
      %v1068 = vsub.f32 %v685, %v1048
      %v1069 = vsub.f32 %v690, %v1051
      %v1070 = vsub.f32 %v693, %v1054
      %v1071 = vsub.f32 %v698, %v1057
      %v1072 = vsub.f32 %v701, %v1060
      %v1073 = vsub.f32 %v706, %v1063
      %v1074 = vsub.f32 %v709, %v1066
      %v1075 = vmul.f32 %v1067, 1.442695
      %v1076 = vpow.pop %v1075
      %v1077 = vmul.f32 %v1068, 1.442695
      %v1078 = vpow.pop %v1077
      %v1079 = vmul.f32 %v1069, 1.442695
      %v1080 = vpow.pop %v1079
      %v1081 = vmul.f32 %v1070, 1.442695
      %v1082 = vpow.pop %v1081
      %v1083 = vmul.f32 %v1071, 1.442695
      %v1084 = vpow.pop %v1083
      %v1085 = vmul.f32 %v1072, 1.442695
      %v1086 = vpow.pop %v1085
      %v1087 = vmul.f32 %v1073, 1.442695
      %v1088 = vpow.pop %v1087
      %v1089 = vmul.f32 %v1074, 1.442695
      %v1090 = vpow.pop %v1089
      %1099 = vrot.lane.b32.xlu0 %v1076, 101
      %v1100 = vpop.permute.xlu0 %1099
      %1101 = vrot.lane.b32.xlu0 %v1078, 101
      %v1102 = vpop.permute.xlu0 %1101
      %1103 = vrot.lane.b32.xlu0 %v1080, 101
      %v1104 = vpop.permute.xlu0 %1103
      %1105 = vrot.lane.b32.xlu0 %v1082, 101
      %v1106 = vpop.permute.xlu0 %1105
      %1107 = vrot.lane.b32.xlu0 %v1084, 101
      %v1108 = vpop.permute.xlu0 %1107
      %1109 = vrot.lane.b32.xlu0 %v1086, 101
      %v1110 = vpop.permute.xlu0 %1109
      %1111 = vrot.lane.b32.xlu0 %v1088, 101
      %v1112 = vpop.permute.xlu0 %1111
      %1113 = vrot.lane.b32.xlu0 %v1090, 101
      %v1114 = vpop.permute.xlu0 %1113
      %v1123 = vsel %vm558, %v1100, 0.0
      %1124 = vadd.xlane.f32.xlu0 %v1123
      %v1125 = vpop.xlane.xlu0 %1124
      %v1126 = vsel %vm558, %v1102, 0.0
      %1127 = vadd.xlane.f32.xlu0 %v1126
      %v1128 = vpop.xlane.xlu0 %1127
      %v1129 = vsel %vm558, %v1104, 0.0
      %1130 = vadd.xlane.f32.xlu0 %v1129
      %v1131 = vpop.xlane.xlu0 %1130
      %v1132 = vsel %vm558, %v1106, 0.0
      %1133 = vadd.xlane.f32.xlu0 %v1132
      %v1134 = vpop.xlane.xlu0 %1133
      %v1135 = vsel %vm558, %v1108, 0.0
      %1136 = vadd.xlane.f32.xlu0 %v1135
      %v1137 = vpop.xlane.xlu0 %1136
      %v1138 = vsel %vm558, %v1110, 0.0
      %1139 = vadd.xlane.f32.xlu0 %v1138
      %v1140 = vpop.xlane.xlu0 %1139
      %v1141 = vsel %vm558, %v1112, 0.0
      %1142 = vadd.xlane.f32.xlu0 %v1141
      %v1143 = vpop.xlane.xlu0 %1142
      %v1144 = vsel %vm558, %v1114, 0.0
      %1145 = vadd.xlane.f32.xlu0 %v1144
      %v1146 = vpop.xlane.xlu0 %1145
      %v1147 = vrcp.pop %v1125
      %v1148 = vrcp.pop %v1128
      %v1149 = vrcp.pop %v1131
      %v1150 = vrcp.pop %v1134
      %v1151 = vrcp.pop %v1137
      %v1152 = vrcp.pop %v1140
      %v1153 = vrcp.pop %v1143
      %v1154 = vrcp.pop %v1146
      %v1155 = vmul.f32 %v1076, %v1147
      %v1156 = vmul.f32 %v1078, %v1148
      %v1157 = vmul.f32 %v1080, %v1149
      %v1158 = vmul.f32 %v1082, %v1150
      %v1159 = vmul.f32 %v1084, %v1151
      %v1160 = vmul.f32 %v1086, %v1152
      %v1161 = vmul.f32 %v1088, %v1153
      %v1162 = vmul.f32 %v1090, %v1154
      %v1163 = vsel %vm558, %v792, %v913
      %v1164 = vsel %vm558, %v793, %v914
      %v1165 = vsel %vm558, %v794, %v915
      %v1166 = vsel %vm558, %v795, %v916
      %v1167 = vsel %vm558, %v796, %v917
      %v1168 = vsel %vm558, %v797, %v918
      %v1169 = vsel %vm558, %v798, %v919
      %v1170 = vsel %vm558, %v799, %v920
      %v1171 = vsel %vm561, %v1163, %v1034
      %v1172 = vsel %vm561, %v1164, %v1035
      %v1173 = vsel %vm561, %v1165, %v1036
      %v1174 = vsel %vm561, %v1166, %v1037
      %v1175 = vsel %vm561, %v1167, %v1038
      %v1176 = vsel %vm561, %v1168, %v1039
      %v1177 = vsel %vm561, %v1169, %v1040
      %v1178 = vsel %vm561, %v1170, %v1041
      %v1179 = vsel %vm564, %v1171, %v1155
      %v1180 = vsel %vm564, %v1172, %v1156
      %v1181 = vsel %vm564, %v1173, %v1157
      %v1182 = vsel %vm564, %v1174, %v1158
      %v1183 = vsel %vm564, %v1175, %v1159
      %v1184 = vsel %vm564, %v1176, %v1160
      %v1185 = vsel %vm564, %v1177, %v1161
      %v1186 = vsel %vm564, %v1178, %v1162
      %v1187 = vpack.c.bf16 %v1180, %v1179
      %v1188 = vpack.c.bf16 %v1182, %v1181
      %v1189 = vpack.c.bf16 %v1184, %v1183
      %v1190 = vpack.c.bf16 %v1186, %v1185
      %vm1191 = vcmask 293888
      %v1193 = vsel %vm1191, %v598, 0
      %v1196 = vsel %vm1191, %v1187, 0
      %v1199 = vsel %vm1191, %v1188, 0
      %v1202 = vsel %vm1191, %v1189, 0
      %v1205 = vsel %vm1191, %v1190, 0
      %1207 = vmatprep.subr.bf16.mxu0 0
      %1208 = vmatpush1.bf16.xpose.msra.mxu0 %v1196
      %1209 = vmatprep.subr.bf16.mxu0 0
      %1210 = vmatpush1.bf16.xpose.msra.mxu0 %v1199
      %1211 = vmatprep.subr.bf16.mxu0 0
      %1212 = vmatpush1.bf16.xpose.msra.mxu0 %v1202
      %1213 = vmatprep.subr.bf16.mxu0 0
      %1214 = vmatpush1.bf16.xpose.msra.mxu0 %v1205
      %1215 = vmatprep.subr.bf16.mxu0 0
      %1216 = vmatpush1.bf16.xpose.msra.mxu0 0
      %1217 = vmatprep.subr.bf16.mxu0 0
      %1218 = vmatpush1.bf16.xpose.msra.mxu0 0
      %1219 = vmatprep.subr.bf16.mxu0 0
      %1220 = vmatpush1.bf16.xpose.msra.mxu0 0
      %1221 = vmatprep.subr.bf16.mxu0 0
      %1222 = vmatpush1.bf16.xpose.msra.mxu0 0
      %1223 = vmatprep.subr.bf16.mxu0 0
      %1224 = vmatpush1.bf16.xpose.msra.mxu0 0
      %1225 = vmatprep.subr.bf16.mxu0 0
      %1226 = vmatpush1.bf16.xpose.msra.mxu0 0
      %1227 = vmatprep.subr.bf16.mxu0 0
      %1228 = vmatpush1.bf16.xpose.msra.mxu0 0
      %1229 = vmatprep.subr.bf16.mxu0 0
      %1230 = vmatpush1.bf16.xpose.msra.mxu0 0
      %1231 = vmatprep.subr.bf16.mxu0 0
      %1232 = vmatpush1.bf16.xpose.msra.mxu0 0
      %1233 = vmatprep.subr.bf16.mxu0 0
      %1234 = vmatpush1.bf16.xpose.msra.mxu0 0
      %1235 = vmatprep.subr.bf16.mxu0 0
      %1236 = vmatpush1.bf16.xpose.msra.mxu0 0
      %1237 = vmatprep.subr.bf16.mxu0 0
      %1238 = vmatpush1.bf16.xpose.msra.mxu0 0
      %1239 = vmatprep.mubr.bf16.mxu0 0
      %1240 = vmatmul.mubr.bf16.gmra.mrb[0].mxu0 %v1193
      %v1241 = vpop.f32.mrb[0].mxu0
      %v1242 = vadd.f32 0.0, %v1241
      %v1243 = vpop.f32.mrb[0].mxu0
      %v1244 = vpop.f32.mrb[0].mxu0
      %v1245 = vadd.f32 0.0, %v1244
      %v1246 = vpop.f32.mrb[0].mxu0
      %1247 = vdwg.mxu0
      %v1248 = vld [vmem:[%s8] sm:$0xf]
      %v1249 = vld [vmem:[%s8 + $0x4] sm:$0xf]
      %v1250 = vpack.c.bf16 %v1245, %v1242
      %v1251 = vld [vmem:[%s9] sm:$0xff]
      %v1252 = vld [vmem:[%s9 + $0x8] sm:$0xff]
      %1254 = vset.pattern.permute.xlu0 0
      %1255 = vperm.xlu0 %1254, %v1251
      %v1256 = vpop.permute.xlu0 %1255
      %1259 = vset.pattern.permute.xlu0 0
      %1260 = vperm.xlu0 %1259, %v1252
      %v1261 = vpop.permute.xlu0 %1260
      %v1265 = vunpack.c.l.b16 %v1248
      %v1266 = vunpack.c.l.b16 %v1249
      %v1267 = vpack.c.b16 %v1266, %v1265
      %v1269 = vsel %vm428, %v1267, 0
      %1271 = vmatprep.subr.bf16.mxu0 0
      %1272 = vmatpush1.bf16.msra.mxu0 %v1250
      %1273 = vmatprep.subr.bf16.mxu0 0
      %1274 = vmatpush1.bf16.msra.mxu0 0
      %1275 = vmatprep.subr.bf16.mxu0 0
      %1276 = vmatpush1.bf16.msra.mxu0 0
      %1277 = vmatprep.subr.bf16.mxu0 0
      %1278 = vmatpush1.bf16.msra.mxu0 0
      %1279 = vmatprep.subr.bf16.mxu0 0
      %1280 = vmatpush1.bf16.msra.mxu0 0
      %1281 = vmatprep.subr.bf16.mxu0 0
      %1282 = vmatpush1.bf16.msra.mxu0 0
      %1283 = vmatprep.subr.bf16.mxu0 0
      %1284 = vmatpush1.bf16.msra.mxu0 0
      %1285 = vmatprep.subr.bf16.mxu0 0
      %1286 = vmatpush1.bf16.msra.mxu0 0
      %1287 = vmatprep.subr.bf16.mxu0 0
      %1288 = vmatpush1.bf16.msra.mxu0 0
      %1289 = vmatprep.subr.bf16.mxu0 0
      %1290 = vmatpush1.bf16.msra.mxu0 0
      %1291 = vmatprep.subr.bf16.mxu0 0
      %1292 = vmatpush1.bf16.msra.mxu0 0
      %1293 = vmatprep.subr.bf16.mxu0 0
      %1294 = vmatpush1.bf16.msra.mxu0 0
      %1295 = vmatprep.subr.bf16.mxu0 0
      %1296 = vmatpush1.bf16.msra.mxu0 0
      %1297 = vmatprep.subr.bf16.mxu0 0
      %1298 = vmatpush1.bf16.msra.mxu0 0
      %1299 = vmatprep.subr.bf16.mxu0 0
      %1300 = vmatpush1.bf16.msra.mxu0 0
      %1301 = vmatprep.subr.bf16.mxu0 0
      %1302 = vmatpush1.bf16.msra.mxu0 0
      %1303 = vmatprep.mubr.bf16.mxu0 0
      %1304 = vmatmul.mubr.bf16.gmra.mrb[0].mxu0 %v1269
      %v1305 = vpop.f32.mrb[0].mxu0
      %v1306 = vadd.f32 %v1256, %v1305
      %v1307 = vpop.f32.mrb[0].mxu0
      %v1308 = vpop.f32.mrb[0].mxu0
      %v1309 = vadd.f32 %v1261, %v1308
      %v1310 = vpop.f32.mrb[0].mxu0
      %1311 = vdwg.mxu0
      %vm1312 = vcmask 523264
      %1313 = vst.msk [vmem:[%s399] sm:$0xff] %vm1312, %v1306
      %1314 = vst.msk [vmem:[%s399 + $0x8] sm:$0xff] %vm1312, %v1309
      %p1315 = scmp.lt.s32.totalorder %s21, 1
      %s1316 = scalar_select %p1315, %s21, 1
      %s1317 = smul.addr %s1316, 2
      %s1318 = smul.addr %s1317, 8
      %s1319 = scalar_lea.vmem %s10, %s1318
      // Predicated region
      $region61: #{run.3} parent=59 // pred_check
        %p1320 = pneg %p264
      $region62: #{run.3} parent=59 // pred_check_branch
        %1322 = sbr.rel (%p1320) target = $region64
      $region63: #{run.3} parent=59 // pred_region
        _
      $region64: #{run.3} parent=59 // pred_fallthru
        _
    $region60: #{run.3} parent=5 // pred_fallthru
      _
    %p1323 = scmp.le.s32.totalorder 2, %s16
    // Predicated region
    $region65: #{run.3} parent=5 // pred_check
      %p1324 = pneg %p1323
    $region66: #{run.3} parent=5 // pred_check_branch
      %1326 = sbr.rel (%p1324) target = $region68
    $region67: #{run.3} parent=5 // pred_region
      %s1327 = ssub.s32 %s16, 2
      // Predicated region
      $region69: #{run.3} parent=67 // pred_check
        %p1328 = pneg %p270
      $region70: #{run.3} parent=67 // pred_check_branch
        %1330 = sbr.rel (%p1328) target = $region72
      $region71: #{run.3} parent=67 // pred_region
        %p1331 = scmp.lt.s32.totalorder %s22, 1
        %s1332 = scalar_select %p1331, %s22, 1
        %s1333 = smul.addr %s1332, 2
        %s1334 = smul.addr %s1333, 8
        %s1335 = scalar_lea.vmem %s10, %s1334
      $region72: #{run.3} parent=67 // pred_fallthru
        _
    $region68: #{run.3} parent=5 // pred_fallthru
      _
  $region6: #{run.3} parent=0 // loop_footer
    %s20 = sadd.s32 1, %s16
  $region7: #{run.3} parent=0 // loop_footer_branch
    %15 = sbr.rel target = $region3
  $region8: #{run.3} parent=0 // loop_exit
    _

</llo_original>
